<compile_context>
chip_gen: v5e
topology: v5e:2x2
jax: 0.10.0
libtpu: 0.0.40
codegen_flags: <defaults>
</compile_context>

<pallas_src>
import functools

import jax
import jax.numpy as jnp
from jax.experimental import pallas as pl
from jax.experimental.pallas import tpu as pltpu


# ----------------------------- Pallas kernel ---------------------------------
def _unimp_kernel(counts_ref,                   # SMEM [nDT, nST] int32 (scalar prefetch)
                  xd_ref, xs_ref,               # [TD, Cin], [TS, Cin]  node features
                  w_ref, b_ref,                 # [Cin, 4C], [1, 4C]    fused w1|w2|w3|w4
                  w5b5_ref,                     # [C, 2]                cols: w5, b5
                  ea_ref, mask_ref,             # [TD, TS] bf16         edge attr / mask
                  out_ref,                      # [TD, C]               node output
                  m_sc, l_sc, acc_sc,           # VMEM scratch: [TD,1],[TD,1],[TD,C]
                  h1_sc, h3_sc,                 # VMEM scratch: [TD,C],[TD,C]
                  cw5_sc, cb5_sc,               # VMEM scratch: [TD,1],[TD,1]
                  *, inv_sqrt_d, cout):
    i = pl.program_id(0)          # dst tile
    k = pl.program_id(1)          # src tile (reduction axis, last)
    n_src = pl.num_programs(1)

    @pl.when(k == 0)
    def _init():
        m_sc[...] = jnp.full_like(m_sc, -1e30)
        l_sc[...] = jnp.zeros_like(l_sc)
        acc_sc[...] = jnp.zeros_like(acc_sc)
        # dst-tile-only work, hoisted out of the src-tile reduction loop.
        wc = w_ref[...].astype(jnp.bfloat16)
        hd = jnp.dot(xd_ref[...].astype(jnp.bfloat16), wc,
                     preferred_element_type=jnp.float32) + b_ref[...]   # [TD, 4C]
        h1_sc[...] = hd[:, 0:cout]                                      # w1(x_i)+b1
        h3 = hd[:, 2 * cout:3 * cout]                                   # w3(x_i)+b3
        h3_sc[...] = h3
        # Fused edge-attr coefficients: c[:,0]=h3.w5, c[:,1]=h3.b5 (single matvec pair).
        c = jnp.dot(h3, w5b5_ref[...], preferred_element_type=jnp.float32)  # [TD, 2]
        cw5_sc[...] = c[:, 0:1]
        cb5_sc[...] = c[:, 1:2]

    # Block-sparse skip: tiles with no edges contribute nothing to the online softmax.
    @pl.when(counts_ref[i, k] > 0)
    def _tile():
        wc = w_ref[...].astype(jnp.bfloat16)
        # One lane-dense (4*Cout = 128 lanes) fused linear for the src slab (MXU, bf16).
        hs = jnp.dot(xs_ref[...].astype(jnp.bfloat16), wc,
                     preferred_element_type=jnp.float32) + b_ref[...]   # [TS, 4C]
        h2 = hs[:, cout:2 * cout]                                       # w2(x_j)+b2
        h4 = hs[:, 3 * cout:4 * cout]                                   # w4(x_j)+b4
        h3 = h3_sc[...]

        # scores[i,j] = h3[i].(h4[j] + ea[i,j]*w5 + b5) / sqrt(d)
        s_pair = jax.lax.dot_general(
            h3.astype(jnp.bfloat16), h4.astype(jnp.bfloat16),
            (((1,), (1,)), ((), ())),
            preferred_element_type=jnp.float32)                         # [TD, TS]
        ea = ea_ref[...].astype(jnp.float32)
        valid = mask_ref[...] > 0
        raw = (s_pair + ea * cw5_sc[...] + cb5_sc[...]) * inv_sqrt_d
        scores = jnp.where(valid, raw, jnp.float32(-1e30))

        # Online softmax update (f32).
        m_prev = m_sc[...]
        m_new = jnp.maximum(m_prev, jnp.max(scores, axis=-1, keepdims=True))
        p = jnp.where(valid, jnp.exp(scores - m_new), 0.0)
        corr = jnp.exp(m_prev - m_new)
        l_sc[...] = corr * l_sc[...] + jnp.sum(p, axis=-1, keepdims=True)
        acc_sc[...] = corr * acc_sc[...] + jnp.dot(
            p.astype(jnp.bfloat16), h2.astype(jnp.bfloat16),
            preferred_element_type=jnp.float32)                         # [TD, C]
        m_sc[...] = m_new

    @pl.when(k == n_src - 1)
    def _finalize():
        # update(): w1(x_i) + softmax-weighted aggregation.
        l = l_sc[...]
        inv_l = pl.reciprocal(jnp.where(l > 0, l, 1.0), approx=True)    # EUP vrcp
        out_ref[...] = (h1_sc[...] + acc_sc[...] * inv_l).astype(out_ref.dtype)


def unimp_gnn_pallas(x_pad, w_cat, b_cat, w5b5, ea_dense, mask, counts,
                     *, out_channels, tile_dst=128, tile_src=128):
    n_pad, cin = x_pad.shape
    n_dt = n_pad // tile_dst
    n_st = n_pad // tile_src
    inv_sqrt_d = 1.0 / (float(out_channels) ** 0.5)
    kernel = functools.partial(_unimp_kernel, inv_sqrt_d=inv_sqrt_d, cout=out_channels)

    grid_spec = pltpu.PrefetchScalarGridSpec(
        num_scalar_prefetch=1,
        grid=(n_dt, n_st),
        in_specs=[
            pl.BlockSpec((tile_dst, cin), lambda i, k, cnt: (i, 0)),         # x (dst slab)
            pl.BlockSpec((tile_src, cin), lambda i, k, cnt: (k, 0)),         # x (src slab)
            pl.BlockSpec((cin, 4 * out_channels), lambda i, k, cnt: (0, 0)), # W_cat
            pl.BlockSpec((1, 4 * out_channels), lambda i, k, cnt: (0, 0)),   # b_cat
            pl.BlockSpec((out_channels, 2), lambda i, k, cnt: (0, 0)),       # [w5 | b5]
            pl.BlockSpec((tile_dst, tile_src), lambda i, k, cnt: (i, k)),    # edge attr
            pl.BlockSpec((tile_dst, tile_src), lambda i, k, cnt: (i, k)),    # mask
        ],
        out_specs=pl.BlockSpec((tile_dst, out_channels), lambda i, k, cnt: (i, 0)),
        scratch_shapes=[
            pltpu.VMEM((tile_dst, 1), jnp.float32),             # running max
            pltpu.VMEM((tile_dst, 1), jnp.float32),             # running denom
            pltpu.VMEM((tile_dst, out_channels), jnp.float32),  # running weighted sum
            pltpu.VMEM((tile_dst, out_channels), jnp.float32),  # h1 (w1 x_i + b1)
            pltpu.VMEM((tile_dst, out_channels), jnp.float32),  # h3 (w3 x_i + b3)
            pltpu.VMEM((tile_dst, 1), jnp.float32),             # h3 . w5
            pltpu.VMEM((tile_dst, 1), jnp.float32),             # h3 . b5
        ],
    )
    cost = pl.CostEstimate(
        flops=4 * n_pad * n_pad * out_channels + 16 * n_pad * cin * out_channels,
        transcendentals=n_pad * n_pad,
        bytes_accessed=2 * 2 * n_pad * n_pad + 4 * n_pad * (cin + out_channels),
    )
    return pl.pallas_call(
        kernel,
        out_shape=jax.ShapeDtypeStruct((n_pad, out_channels), jnp.float32),
        grid_spec=grid_spec,
        compiler_params=pltpu.CompilerParams(
            dimension_semantics=("parallel", "arbitrary"),
            vmem_limit_bytes=32 * 1024 * 1024,
        ),
        cost_estimate=cost,
    )(counts, x_pad, x_pad, w_cat, b_cat, w5b5, ea_dense, mask)


# --------------------------- pure-JAX reference -------------------------------
def unimp_gnn_ref(x, edge_index, edge_attr, batch, num_graphs,
                  weights, biases, w5, b5, out_channels):
    src, dst = edge_index[0], edge_index[1]          # x_j = x[src], x_i = x[dst]
    N = x.shape[0]
    h1 = x @ weights[0] + biases[0]
    h2 = x @ weights[1] + biases[1]
    h3 = x @ weights[2] + biases[2]
    h4 = x @ weights[3] + biases[3]
    ea_t = edge_attr @ w5 + b5                       # (E,1)@(1,C)+(1,C) -> (E,C)
    scores = jnp.sum(h3[dst] * (h4[src] + ea_t), axis=-1) / jnp.sqrt(
        jnp.float32(out_channels))
    smax = jax.ops.segment_max(scores, dst, num_segments=N)
    alpha = jnp.exp(scores - smax[dst])
    denom = jax.ops.segment_sum(alpha, dst, num_segments=N)
    alpha = alpha / denom[dst]
    msg = alpha[:, None] * h2[src]
    aggr = jax.ops.segment_sum(msg, dst, num_segments=N)
    node_out = h1 + aggr
    pooled = jax.ops.segment_sum(node_out, batch, num_segments=num_graphs)
    cnt = jax.ops.segment_sum(jnp.ones((N,), jnp.float32), batch,
                              num_segments=num_graphs)
    return pooled / cnt[:, None]


# ------------------------------------ main ------------------------------------
if __name__ == "__main__":
    key = jax.random.PRNGKey(0)

    in_channels = 8
    out_channels = 32
    nodes_per_graph = 72
    num_graphs = 2
    N = nodes_per_graph * num_graphs                  # 144 real nodes
    TD = TS = 128
    N_pad = ((N + TD - 1) // TD) * TD                 # 256 -> 2x2 tile grid

    # Parameters (shapes match the nn.Linear layers; already in x@W orientation).
    k = jax.random.split(key, 8)
    weights = 0.1 * jax.random.normal(k[0], (4, in_channels, out_channels), jnp.float32)
    biases = 0.1 * jax.random.normal(k[1], (4, out_channels), jnp.float32)
    w5 = 0.1 * jax.random.normal(k[2], (1, out_channels), jnp.float32)   # Linear(1, Cout)
    b5 = 0.1 * jax.random.normal(k[3], (1, out_channels), jnp.float32)

    # Node features.
    x = jax.random.normal(k[4], (N, in_channels), jnp.float32)

    # Graph structure: each node sends edges to (n+1) and (n+2) within its graph
    # (in-degree 2 per node -> non-trivial softmax; no duplicate edges).
    src_list, dst_list, batch_list = [], [], []
    for g in range(num_graphs):
        base = g * nodes_per_graph
        for n in range(nodes_per_graph):
            batch_list.append(g)
            for hop in (1, 2):
                src_list.append(base + n)
                dst_list.append(base + (n + hop) % nodes_per_graph)
    edge_index = jnp.array([src_list, dst_list], dtype=jnp.int32)        # [2, E]
    E = edge_index.shape[1]
    edge_attr = jax.random.normal(k[5], (E, 1), jnp.float32)
    batch = jnp.array(batch_list, dtype=jnp.int32)                       # [N]

    # ---- JAX glue: densify + pad (bf16 for the two N^2 arrays to halve HBM traffic) ----
    src, dst = edge_index[0], edge_index[1]
    x_pad = jnp.zeros((N_pad, in_channels), jnp.float32).at[:N].set(x)
    mask = jnp.zeros((N_pad, N_pad), jnp.bfloat16).at[dst, src].set(1.0)
    ea_dense = jnp.zeros((N_pad, N_pad), jnp.bfloat16).at[dst, src].set(
        edge_attr[:, 0].astype(jnp.bfloat16))
    # Per-(dst_tile, src_tile) edge counts for block-sparse skipping.
    counts = jnp.zeros((N_pad // TD, N_pad // TS), jnp.int32).at[dst // TD, src // TS].add(1)

    # Fused linear parameters: W_cat = [w1|w2|w3|w4] -> [Cin, 4*Cout] (128 lanes).
    w_cat = jnp.concatenate([weights[0], weights[1], weights[2], weights[3]], axis=1)
    b_cat = jnp.concatenate([biases[0], biases[1], biases[2], biases[3]])[None, :]
    w5b5 = jnp.stack([w5[0], b5[0]], axis=1)                             # [Cout, 2]

    # ---- Pallas kernel: per-node UniMP layer output (padded) ----
    node_out_pad = unimp_gnn_pallas(x_pad, w_cat, b_cat, w5b5, ea_dense, mask, counts,
                                    out_channels=out_channels, tile_dst=TD, tile_src=TS)
    node_out_pad = jax.block_until_ready(node_out_pad)

    # global_mean_pool as a tiny dense matmul in plain JAX.
    onehot = (batch[None, :] == jnp.arange(num_graphs)[:, None]).astype(jnp.float32)
    pool = onehot / jnp.sum(onehot, axis=1, keepdims=True)               # [G, N]
    out = pool @ node_out_pad[:N]
    out = jax.block_until_ready(out)

    # ---- reference check (f32 everywhere; kernel uses bf16 MXU operands) ----
    ref = unimp_gnn_ref(x, edge_index, edge_attr, batch, num_graphs,
                        weights, biases, w5, b5, out_channels)
    assert out.shape == (num_graphs, out_channels)
    assert bool(jnp.all(jnp.isfinite(out)))
    assert jnp.allclose(out, ref, rtol=2e-2, atol=2e-2), (out, ref)

    # TODO(synk): the aggregate=False branch (reshape to adj_size + agent_ids gather) is
    # plain indexing glue and is not exercised here.
    print("KERNEL_OK")
</pallas_src>

<mosaic_0001>
module attributes {stable_mosaic.version = 11 : i64} {
  func.func @_unimp_kernel(%arg0: i32, %arg1: i32, %arg2: memref<2x2xi32, #tpu.memory_space<smem>>, %arg3: memref<128x8xf32, #tpu.memory_space<vmem>>, %arg4: memref<128x8xf32, #tpu.memory_space<vmem>>, %arg5: memref<8x128xf32, #tpu.memory_space<vmem>>, %arg6: memref<1x128xf32, #tpu.memory_space<vmem>>, %arg7: memref<32x2xf32, #tpu.memory_space<vmem>>, %arg8: memref<128x128xbf16, #tpu.memory_space<vmem>>, %arg9: memref<128x128xbf16, #tpu.memory_space<vmem>>, %arg10: memref<128x32xf32, #tpu.memory_space<vmem>>, %arg11: memref<128x1xf32, #tpu.memory_space<vmem>>, %arg12: memref<128x1xf32, #tpu.memory_space<vmem>>, %arg13: memref<128x32xf32, #tpu.memory_space<vmem>>, %arg14: memref<128x32xf32, #tpu.memory_space<vmem>>, %arg15: memref<128x32xf32, #tpu.memory_space<vmem>>, %arg16: memref<128x1xf32, #tpu.memory_space<vmem>>, %arg17: memref<128x1xf32, #tpu.memory_space<vmem>>) attributes {dimension_semantics = [#tpu.dimension_semantics<parallel>, #tpu.dimension_semantics<arbitrary>], iteration_bounds = array<i64: 2, 2>, scalar_prefetch = 1 : i64, scratch_operands = 7 : i64, tpu.core_type = #tpu.core_type<tc>, window_params = [{transform_indices = @transform_0, window_bounds = array<i64: 128, 8>}, {transform_indices = @transform_1, window_bounds = array<i64: 128, 8>}, {pipeline_mode = #tpu.pipeline_mode<synchronous>, transform_indices = @transform_2, window_bounds = array<i64: 8, 128>}, {pipeline_mode = #tpu.pipeline_mode<synchronous>, transform_indices = @transform_3, window_bounds = array<i64: 1, 128>}, {pipeline_mode = #tpu.pipeline_mode<synchronous>, transform_indices = @transform_4, window_bounds = array<i64: 32, 2>}, {transform_indices = @transform_5, window_bounds = array<i64: 128, 128>}, {transform_indices = @transform_6, window_bounds = array<i64: 128, 128>}, {transform_indices = @transform_7, window_bounds = array<i64: 128, 32>}]} {
    %c0_i32 = arith.constant 0 : i32
    %0 = arith.cmpi eq, %arg1, %c0_i32 : i32
    %1 = arith.extui %0 : i1 to i32
    %c0_i32_0 = arith.constant 0 : i32
    %2 = arith.cmpi ne, %1, %c0_i32_0 : i32
    scf.if %2 {
      %cst = arith.constant -1.000000e+30 : f32
      %12 = vector.broadcast %cst : f32 to vector<128x1xf32>
      %c0 = arith.constant 0 : index
      %c0_4 = arith.constant 0 : index
      %13 = vector.load %arg11[%c0, %c0_4] : memref<128x1xf32, #tpu.memory_space<vmem>>, vector<128x1xf32>
      tpu.vector_store %arg11[%c0, %c0_4], %12 {strides = array<i32>} : memref<128x1xf32, #tpu.memory_space<vmem>>, vector<128x1xf32>,
      %cst_5 = arith.constant 0.000000e+00 : f32
      %14 = vector.broadcast %cst_5 : f32 to vector<128x1xf32>
      %c0_6 = arith.constant 0 : index
      %c0_7 = arith.constant 0 : index
      %15 = vector.load %arg12[%c0_6, %c0_7] : memref<128x1xf32, #tpu.memory_space<vmem>>, vector<128x1xf32>
      tpu.vector_store %arg12[%c0_6, %c0_7], %14 {strides = array<i32>} : memref<128x1xf32, #tpu.memory_space<vmem>>, vector<128x1xf32>,
      %cst_8 = arith.constant 0.000000e+00 : f32
      %16 = vector.broadcast %cst_8 : f32 to vector<128x32xf32>
      %c0_9 = arith.constant 0 : index
      %c0_10 = arith.constant 0 : index
      %17 = vector.load %arg13[%c0_9, %c0_10] : memref<128x32xf32, #tpu.memory_space<vmem>>, vector<128x32xf32>
      tpu.vector_store %arg13[%c0_9, %c0_10], %16 {strides = array<i32>} : memref<128x32xf32, #tpu.memory_space<vmem>>, vector<128x32xf32>,
      %c0_11 = arith.constant 0 : index
      %c0_12 = arith.constant 0 : index
      %18 = vector.load %arg5[%c0_11, %c0_12] : memref<8x128xf32, #tpu.memory_space<vmem>>, vector<8x128xf32>
      %19 = arith.truncf %18 : vector<8x128xf32> to vector<8x128xbf16>
      %c0_13 = arith.constant 0 : index
      %c0_14 = arith.constant 0 : index
      %20 = vector.load %arg3[%c0_13, %c0_14] : memref<128x8xf32, #tpu.memory_space<vmem>>, vector<128x8xf32>
      %21 = arith.truncf %20 : vector<128x8xf32> to vector<128x8xbf16>
      %cst_15 = arith.constant dense<0.000000e+00> : vector<128x128xf32>
      %22 = tpu.matmul %21, %19, %cst_15 {dimension_numbers = #tpu.dot_dimension_numbers<[1], [0], [0], [1], [0, 0, 1, 1], [], []>} : vector<128x8xbf16>, vector<8x128xbf16>, vector<128x128xf32> -> vector<128x128xf32>
      %c0_16 = arith.constant 0 : index
      %c0_17 = arith.constant 0 : index
      %23 = vector.load %arg6[%c0_16, %c0_17] : memref<1x128xf32, #tpu.memory_space<vmem>>, vector<1x128xf32>
      %24 = vector.broadcast %23 : vector<1x128xf32> to vector<128x128xf32>
      %25 = arith.addf %22, %24 : vector<128x128xf32>
      %26 = vector.extract_strided_slice %25 {offsets = [0, 0], sizes = [128, 32], strides = [1, 1]} : vector<128x128xf32> to vector<128x32xf32>
      %c0_18 = arith.constant 0 : index
      %c0_19 = arith.constant 0 : index
      %27 = vector.load %arg14[%c0_18, %c0_19] : memref<128x32xf32, #tpu.memory_space<vmem>>, vector<128x32xf32>
      tpu.vector_store %arg14[%c0_18, %c0_19], %26 {strides = array<i32>} : memref<128x32xf32, #tpu.memory_space<vmem>>, vector<128x32xf32>,
      %28 = vector.extract_strided_slice %25 {offsets = [0, 64], sizes = [128, 32], strides = [1, 1]} : vector<128x128xf32> to vector<128x32xf32>
      %c0_20 = arith.constant 0 : index
      %c0_21 = arith.constant 0 : index
      %29 = vector.load %arg15[%c0_20, %c0_21] : memref<128x32xf32, #tpu.memory_space<vmem>>, vector<128x32xf32>
      tpu.vector_store %arg15[%c0_20, %c0_21], %28 {strides = array<i32>} : memref<128x32xf32, #tpu.memory_space<vmem>>, vector<128x32xf32>,
      %c0_22 = arith.constant 0 : index
      %c0_23 = arith.constant 0 : index
      %30 = vector.load %arg7[%c0_22, %c0_23] : memref<32x2xf32, #tpu.memory_space<vmem>>, vector<32x2xf32>
      %cst_24 = arith.constant dense<0.000000e+00> : vector<128x2xf32>
      %31 = tpu.matmul %28, %30, %cst_24 {dimension_numbers = #tpu.dot_dimension_numbers<[1], [0], [0], [1], [0, 0, 1, 1], [], []>} : vector<128x32xf32>, vector<32x2xf32>, vector<128x2xf32> -> vector<128x2xf32>
      %32 = vector.extract_strided_slice %31 {offsets = [0, 0], sizes = [128, 1], strides = [1, 1]} : vector<128x2xf32> to vector<128x1xf32>
      %c0_25 = arith.constant 0 : index
      %c0_26 = arith.constant 0 : index
      %33 = vector.load %arg16[%c0_25, %c0_26] : memref<128x1xf32, #tpu.memory_space<vmem>>, vector<128x1xf32>
      tpu.vector_store %arg16[%c0_25, %c0_26], %32 {strides = array<i32>} : memref<128x1xf32, #tpu.memory_space<vmem>>, vector<128x1xf32>,
      %34 = vector.extract_strided_slice %31 {offsets = [0, 1], sizes = [128, 1], strides = [1, 1]} : vector<128x2xf32> to vector<128x1xf32>
      %c0_27 = arith.constant 0 : index
      %c0_28 = arith.constant 0 : index
      %35 = vector.load %arg17[%c0_27, %c0_28] : memref<128x1xf32, #tpu.memory_space<vmem>>, vector<128x1xf32>
      tpu.vector_store %arg17[%c0_27, %c0_28], %34 {strides = array<i32>} : memref<128x1xf32, #tpu.memory_space<vmem>>, vector<128x1xf32>,
    } else {
    }
    %3 = arith.index_cast %arg0 : i32 to index
    %4 = arith.index_cast %arg1 : i32 to index
    %5 = memref.load %arg2[%3, %4] : memref<2x2xi32, #tpu.memory_space<smem>>
    %c0_i32_1 = arith.constant 0 : i32
    %6 = arith.cmpi sgt, %5, %c0_i32_1 : i32
    %7 = arith.extui %6 : i1 to i32
    %c0_i32_2 = arith.constant 0 : i32
    %8 = arith.cmpi ne, %7, %c0_i32_2 : i32
    scf.if %8 {
      %c0 = arith.constant 0 : index
      %c0_4 = arith.constant 0 : index
      %12 = vector.load %arg5[%c0, %c0_4] : memref<8x128xf32, #tpu.memory_space<vmem>>, vector<8x128xf32>
      %13 = arith.truncf %12 : vector<8x128xf32> to vector<8x128xbf16>
      %c0_5 = arith.constant 0 : index
      %c0_6 = arith.constant 0 : index
      %14 = vector.load %arg4[%c0_5, %c0_6] : memref<128x8xf32, #tpu.memory_space<vmem>>, vector<128x8xf32>
      %15 = arith.truncf %14 : vector<128x8xf32> to vector<128x8xbf16>
      %cst = arith.constant dense<0.000000e+00> : vector<128x128xf32>
      %16 = tpu.matmul %15, %13, %cst {dimension_numbers = #tpu.dot_dimension_numbers<[1], [0], [0], [1], [0, 0, 1, 1], [], []>} : vector<128x8xbf16>, vector<8x128xbf16>, vector<128x128xf32> -> vector<128x128xf32>
      %c0_7 = arith.constant 0 : index
      %c0_8 = arith.constant 0 : index
      %17 = vector.load %arg6[%c0_7, %c0_8] : memref<1x128xf32, #tpu.memory_space<vmem>>, vector<1x128xf32>
      %18 = vector.broadcast %17 : vector<1x128xf32> to vector<128x128xf32>
      %19 = arith.addf %16, %18 : vector<128x128xf32>
      %20 = vector.extract_strided_slice %19 {offsets = [0, 32], sizes = [128, 32], strides = [1, 1]} : vector<128x128xf32> to vector<128x32xf32>
      %21 = vector.extract_strided_slice %19 {offsets = [0, 96], sizes = [128, 32], strides = [1, 1]} : vector<128x128xf32> to vector<128x32xf32>
      %c0_9 = arith.constant 0 : index
      %c0_10 = arith.constant 0 : index
      %22 = vector.load %arg15[%c0_9, %c0_10] : memref<128x32xf32, #tpu.memory_space<vmem>>, vector<128x32xf32>
      %23 = arith.truncf %22 : vector<128x32xf32> to vector<128x32xbf16>
      %24 = arith.truncf %21 : vector<128x32xf32> to vector<128x32xbf16>
      %cst_11 = arith.constant dense<0.000000e+00> : vector<128x128xf32>
      %25 = tpu.matmul %23, %24, %cst_11 {dimension_numbers = #tpu.dot_dimension_numbers<[1], [1], [0], [0], [0, 0, 1, 0], [], []>} : vector<128x32xbf16>, vector<128x32xbf16>, vector<128x128xf32> -> vector<128x128xf32>
      %c0_12 = arith.constant 0 : index
      %c0_13 = arith.constant 0 : index
      %26 = vector.load %arg8[%c0_12, %c0_13] : memref<128x128xbf16, #tpu.memory_space<vmem>>, vector<128x128xbf16>
      %27 = arith.extf %26 : vector<128x128xbf16> to vector<128x128xf32>
      %c0_14 = arith.constant 0 : index
      %c0_15 = arith.constant 0 : index
      %28 = vector.load %arg9[%c0_14, %c0_15] : memref<128x128xbf16, #tpu.memory_space<vmem>>, vector<128x128xbf16>
      %cst_16 = arith.constant 0.000000e+00 : bf16
      %29 = vector.broadcast %cst_16 : bf16 to vector<128x128xbf16>
      %30 = arith.cmpf ogt, %28, %29 : vector<128x128xbf16>
      %c0_17 = arith.constant 0 : index
      %c0_18 = arith.constant 0 : index
      %31 = vector.load %arg16[%c0_17, %c0_18] : memref<128x1xf32, #tpu.memory_space<vmem>>, vector<128x1xf32>
      %32 = vector.broadcast %31 : vector<128x1xf32> to vector<128x128xf32>
      %33 = arith.mulf %27, %32 : vector<128x128xf32>
      %34 = arith.addf %25, %33 : vector<128x128xf32>
      %c0_19 = arith.constant 0 : index
      %c0_20 = arith.constant 0 : index
      %35 = vector.load %arg17[%c0_19, %c0_20] : memref<128x1xf32, #tpu.memory_space<vmem>>, vector<128x1xf32>
      %36 = vector.broadcast %35 : vector<128x1xf32> to vector<128x128xf32>
      %37 = arith.addf %34, %36 : vector<128x128xf32>
      %cst_21 = arith.constant 0.176776692 : f32
      %38 = vector.broadcast %cst_21 : f32 to vector<128x128xf32>
      %39 = arith.mulf %37, %38 : vector<128x128xf32>
      %cst_22 = arith.constant -1.000000e+30 : f32
      %40 = vector.broadcast %cst_22 : f32 to vector<128x128xf32>
      %41 = arith.select %30, %39, %40 : vector<128x128xi1>, vector<128x128xf32>
      %c0_23 = arith.constant 0 : index
      %c0_24 = arith.constant 0 : index
      %42 = vector.load %arg11[%c0_23, %c0_24] : memref<128x1xf32, #tpu.memory_space<vmem>>, vector<128x1xf32>
      %cst_25 = arith.constant dense<0xFF800000> : vector<128xf32>
      %43 = vector.multi_reduction <maximumf>, %41, %cst_25 [1] : vector<128x128xf32> to vector<128xf32>
      %44 = vector.shape_cast %43 : vector<128xf32> to vector<128x1xf32>
      %45 = arith.maximumf %42, %44 : vector<128x1xf32>
      %46 = vector.broadcast %45 : vector<128x1xf32> to vector<128x128xf32>
      %47 = arith.subf %41, %46 : vector<128x128xf32>
      %48 = math.exp %47 : vector<128x128xf32>
      %cst_26 = arith.constant 0.000000e+00 : f32
      %49 = vector.broadcast %cst_26 : f32 to vector<128x128xf32>
      %50 = arith.select %30, %48, %49 : vector<128x128xi1>, vector<128x128xf32>
      %51 = arith.subf %42, %45 : vector<128x1xf32>
      %52 = math.exp %51 : vector<128x1xf32>
      %c0_27 = arith.constant 0 : index
      %c0_28 = arith.constant 0 : index
      %53 = vector.load %arg12[%c0_27, %c0_28] : memref<128x1xf32, #tpu.memory_space<vmem>>, vector<128x1xf32>
      %54 = arith.mulf %52, %53 : vector<128x1xf32>
      %cst_29 = arith.constant dense<0.000000e+00> : vector<128xf32>
      %55 = vector.multi_reduction <add>, %50, %cst_29 [1] : vector<128x128xf32> to vector<128xf32>
      %56 = vector.shape_cast %55 : vector<128xf32> to vector<128x1xf32>
      %57 = arith.addf %54, %56 : vector<128x1xf32>
      %c0_30 = arith.constant 0 : index
      %c0_31 = arith.constant 0 : index
      %58 = vector.load %arg12[%c0_30, %c0_31] : memref<128x1xf32, #tpu.memory_space<vmem>>, vector<128x1xf32>
      tpu.vector_store %arg12[%c0_30, %c0_31], %57 {strides = array<i32>} : memref<128x1xf32, #tpu.memory_space<vmem>>, vector<128x1xf32>,
      %c0_32 = arith.constant 0 : index
      %c0_33 = arith.constant 0 : index
      %59 = vector.load %arg13[%c0_32, %c0_33] : memref<128x32xf32, #tpu.memory_space<vmem>>, vector<128x32xf32>
      %60 = vector.broadcast %52 : vector<128x1xf32> to vector<128x32xf32>
      %61 = arith.mulf %60, %59 : vector<128x32xf32>
      %62 = arith.truncf %50 : vector<128x128xf32> to vector<128x128xbf16>
      %63 = arith.truncf %20 : vector<128x32xf32> to vector<128x32xbf16>
      %cst_34 = arith.constant dense<0.000000e+00> : vector<128x32xf32>
      %64 = tpu.matmul %62, %63, %cst_34 {dimension_numbers = #tpu.dot_dimension_numbers<[1], [0], [0], [1], [0, 0, 1, 1], [], []>} : vector<128x128xbf16>, vector<128x32xbf16>, vector<128x32xf32> -> vector<128x32xf32>
      %65 = arith.addf %61, %64 : vector<128x32xf32>
      %c0_35 = arith.constant 0 : index
      %c0_36 = arith.constant 0 : index
      %66 = vector.load %arg13[%c0_35, %c0_36] : memref<128x32xf32, #tpu.memory_space<vmem>>, vector<128x32xf32>
      tpu.vector_store %arg13[%c0_35, %c0_36], %65 {strides = array<i32>} : memref<128x32xf32, #tpu.memory_space<vmem>>, vector<128x32xf32>,
      %c0_37 = arith.constant 0 : index
      %c0_38 = arith.constant 0 : index
      %67 = vector.load %arg11[%c0_37, %c0_38] : memref<128x1xf32, #tpu.memory_space<vmem>>, vector<128x1xf32>
      tpu.vector_store %arg11[%c0_37, %c0_38], %45 {strides = array<i32>} : memref<128x1xf32, #tpu.memory_space<vmem>>, vector<128x1xf32>,
    } else {
    }
    %c1_i32 = arith.constant 1 : i32
    %9 = arith.cmpi eq, %arg1, %c1_i32 : i32
    %10 = arith.extui %9 : i1 to i32
    %c0_i32_3 = arith.constant 0 : i32
    %11 = arith.cmpi ne, %10, %c0_i32_3 : i32
    scf.if %11 {
      %c0 = arith.constant 0 : index
      %c0_4 = arith.constant 0 : index
      %12 = vector.load %arg12[%c0, %c0_4] : memref<128x1xf32, #tpu.memory_space<vmem>>, vector<128x1xf32>
      %cst = arith.constant 0.000000e+00 : f32
      %13 = vector.broadcast %cst : f32 to vector<128x1xf32>
      %14 = arith.cmpf ogt, %12, %13 : vector<128x1xf32>
      %cst_5 = arith.constant 1.000000e+00 : f32
      %15 = vector.broadcast %cst_5 : f32 to vector<128x1xf32>
      %16 = arith.select %14, %12, %15 : vector<128x1xi1>, vector<128x1xf32>
      %17 = tpu.reciprocal %16 {approx = true} : vector<128x1xf32> -> vector<128x1xf32>
      %c0_6 = arith.constant 0 : index
      %c0_7 = arith.constant 0 : index
      %18 = vector.load %arg14[%c0_6, %c0_7] : memref<128x32xf32, #tpu.memory_space<vmem>>, vector<128x32xf32>
      %c0_8 = arith.constant 0 : index
      %c0_9 = arith.constant 0 : index
      %19 = vector.load %arg13[%c0_8, %c0_9] : memref<128x32xf32, #tpu.memory_space<vmem>>, vector<128x32xf32>
      %20 = vector.broadcast %17 : vector<128x1xf32> to vector<128x32xf32>
      %21 = arith.mulf %19, %20 : vector<128x32xf32>
      %22 = arith.addf %18, %21 : vector<128x32xf32>
      %c0_10 = arith.constant 0 : index
      %c0_11 = arith.constant 0 : index
      %23 = vector.load %arg10[%c0_10, %c0_11] : memref<128x32xf32, #tpu.memory_space<vmem>>, vector<128x32xf32>
      tpu.vector_store %arg10[%c0_10, %c0_11], %22 {strides = array<i32>} : memref<128x32xf32, #tpu.memory_space<vmem>>, vector<128x32xf32>,
    } else {
    }
    return
  }
  func.func @transform_0(%arg0: i32, %arg1: i32, %arg2: memref<2x2xi32, #tpu.memory_space<smem>>) -> (i32, i32) {
    %c0_i32 = arith.constant 0 : i32
    %c0_i32_0 = arith.constant 0 : i32
    return %arg0, %c0_i32 : i32, i32
  }
  func.func @transform_1(%arg0: i32, %arg1: i32, %arg2: memref<2x2xi32, #tpu.memory_space<smem>>) -> (i32, i32) {
    %c0_i32 = arith.constant 0 : i32
    %c0_i32_0 = arith.constant 0 : i32
    return %arg1, %c0_i32 : i32, i32
  }
  func.func @transform_2(%arg0: i32, %arg1: i32, %arg2: memref<2x2xi32, #tpu.memory_space<smem>>) -> (i32, i32) {
    %c0_i32 = arith.constant 0 : i32
    %c0_i32_0 = arith.constant 0 : i32
    %c0_i32_1 = arith.constant 0 : i32
    return %c0_i32, %c0_i32_0 : i32, i32
  }
  func.func @transform_3(%arg0: i32, %arg1: i32, %arg2: memref<2x2xi32, #tpu.memory_space<smem>>) -> (i32, i32) {
    %c0_i32 = arith.constant 0 : i32
    %c0_i32_0 = arith.constant 0 : i32
    %c0_i32_1 = arith.constant 0 : i32
    return %c0_i32, %c0_i32_0 : i32, i32
  }
  func.func @transform_4(%arg0: i32, %arg1: i32, %arg2: memref<2x2xi32, #tpu.memory_space<smem>>) -> (i32, i32) {
    %c0_i32 = arith.constant 0 : i32
    %c0_i32_0 = arith.constant 0 : i32
    %c0_i32_1 = arith.constant 0 : i32
    return %c0_i32, %c0_i32_0 : i32, i32
  }
  func.func @transform_5(%arg0: i32, %arg1: i32, %arg2: memref<2x2xi32, #tpu.memory_space<smem>>) -> (i32, i32) {
    %c0_i32 = arith.constant 0 : i32
    return %arg0, %arg1 : i32, i32
  }
  func.func @transform_6(%arg0: i32, %arg1: i32, %arg2: memref<2x2xi32, #tpu.memory_space<smem>>) -> (i32, i32) {
    %c0_i32 = arith.constant 0 : i32
    return %arg0, %arg1 : i32, i32
  }
  func.func @transform_7(%arg0: i32, %arg1: i32, %arg2: memref<2x2xi32, #tpu.memory_space<smem>>) -> (i32, i32) {
    %c0_i32 = arith.constant 0 : i32
    %c0_i32_0 = arith.constant 0 : i32
    return %arg0, %c0_i32 : i32, i32
  }
}

</mosaic_0001>

<llo_original>
// kernel: tpu_custom_call.1
$region0: #{tpu_custom_call.1}
  #allocation0 [shape = 'u32[]', space=smem, size = 0x4, offset = 0x4, fixed_abs, tag = 'smem constant byte address 0x4 - core index']
  #allocation1 [shape = 'u32[72,128]{1,0:T(1,128)}', space=vmem, size = 0x9000, scoped, tag = 'internal scratch']
  #allocation2 [shape = 'f32[128,1]{1,0:T(8,128)}', space=vmem, size = 0x10000, scoped, tag = 'scratch operand']
  #allocation3 [shape = 'f32[128,1]{1,0:T(8,128)}', space=vmem, size = 0x10000, scoped, tag = 'scratch operand']
  #allocation4 [shape = 'f32[128,32]{1,0:T(8,128)}', space=vmem, size = 0x10000, scoped, tag = 'scratch operand']
  #allocation5 [shape = 'f32[128,32]{1,0:T(8,128)}', space=vmem, size = 0x10000, scoped, tag = 'scratch operand']
  #allocation6 [shape = 'f32[128,32]{1,0:T(8,128)}', space=vmem, size = 0x10000, scoped, tag = 'scratch operand']
  #allocation7 [shape = 'f32[128,1]{1,0:T(8,128)}', space=vmem, size = 0x10000, scoped, tag = 'scratch operand']
  #allocation8 [shape = 'f32[128,1]{1,0:T(8,128)}', space=vmem, size = 0x10000, scoped, tag = 'scratch operand']
  #allocation9 [shape = 's32[1]{0}', space=sflag, size = 0x4, scoped, tag = 'scoped memory for tpu_custom_call.1']
  #allocation10 [shape = 'u8[1024]{0}', space=smem, size = 0x400, scoped, tag = 'prefetched SMEM operand 0']
  %s0 = inlined_call_operand.vmem [shape: s32[2,2], index: 0, kind: input, shape index: {}]
  %s1 = inlined_call_operand.vmem [shape: f32[256,8], index: 1, kind: input, shape index: {}]
  %s2 = inlined_call_operand.vmem [shape: f32[256,8], index: 2, kind: input, shape index: {}]
  %s3 = inlined_call_operand.vmem [shape: f32[8,128], index: 3, kind: input, shape index: {}]
  %s4 = inlined_call_operand.vmem [shape: f32[1,128], index: 4, kind: input, shape index: {}]
  %s5 = inlined_call_operand.vmem [shape: f32[32,2], index: 5, kind: input, shape index: {}]
  %s6 = inlined_call_operand.vmem [shape: bf16[256,256], index: 6, kind: input, shape index: {}]
  %s7 = inlined_call_operand.vmem [shape: bf16[256,256], index: 7, kind: input, shape index: {}]
  %s8 = inlined_call_operand.vmem [shape: f32[256,32], index: 8, kind: output, shape index: {}]
  %s9 = sld [smem:[#allocation0]]
  $region155: #{tpu_custom_call.1} parent=0
    _
  %s11 = ssub.s32 1, %s9
  %s12 = scalar_select 0, %s11, %s9
  %s14 = sshll.u32 %s0, 4
  %s15 = int_to_ptr.vmem [resolvable:$true] %s14
  %17 = dma.vmem_to_smem %s15, 32, [#allocation10], [#allocation9]
  %19 = dma.done [#allocation9], 32
  %20 = sfence
  $region1: #{tpu_custom_call.1} parent=0
    #allocation11 [shape = 'u8[65536]{0}', space=vmem, size = 0x10000, scoped, tag = 'input window, operand 6']
    #allocation12 [shape = 'u8[65536]{0}', space=vmem, size = 0x10000, scoped, tag = 'input window, operand 7']
    loop: start=0, step=1, limit=6
    $region2: #{tpu_custom_call.1} parent=1 // loop_pre_header
      _
    $region3: #{tpu_custom_call.1} parent=1 // loop_header
      %s22 = sphi 0, %s26
      %p23 = scmp.ge.s32.totalorder %s22, 6
      %s29 = sphi 0, %s41
      %s30 = sphi 0, %s37
      %s31 = sphi 0, %s29
      %s32 = sphi 0, %s30
      %s33 = sphi 0, %s31
      %s34 = sphi 0, %s32
      %s44 = sphi 0, %s46
      %s47 = sphi 0, %s44
      %s48 = sphi 0, %s47
      %s64 = sphi 0, %s48
      %s70 = sphi 0, %s72
      %s73 = sphi 0, %s70
      %s74 = sphi 0, %s73
      %s90 = sphi 0, %s74
      %s94 = sphi 0, %s94
      %s96 = sphi 0, %s94
      %s97 = sphi 0, %s96
      %s111 = sphi 0, %s97
      %s115 = sphi 0, %s115
      %s117 = sphi 0, %s115
      %s118 = sphi 0, %s117
      %s132 = sphi 0, %s118
      %s136 = sphi 0, %s136
      %s138 = sphi 0, %s136
      %s139 = sphi 0, %s138
      %s153 = sphi 0, %s139
      %s161 = sphi 0, %s163
      %s164 = sphi 0, %s161
      %s165 = sphi 0, %s164
      %s181 = sphi 0, %s165
      %s189 = sphi 0, %s191
      %s192 = sphi 0, %s189
      %s193 = sphi 0, %s192
      %s209 = sphi 0, %s193
      %s215 = sphi 0, %s217
      %s218 = sphi 0, %s215
      %s219 = sphi 0, %s218
      %s235 = sphi 0, %s219
    $region4: #{tpu_custom_call.1} parent=1 // loop_header_branch
      %25 = sbr.rel (%p23) target = $region8
    $region5: #{tpu_custom_call.1} parent=1 // loop_body
      %s27 = ssub.s32 %s22, 1
      %s28 = ssub.s32 %s22, 2
      %s35 = sadd.s32 1, %s30
      %p36 = scmp.ge.s32.totalorder %s35, 2
      %s37 = scalar_select %p36, 0, %s35
      %s38 = sadd.s32 1, %s29
      %s39 = scalar_select %p36, %s38, %s29
      %p40 = scmp.ge.s32.totalorder %s39, 2
      %s41 = scalar_select %p40, 0, %s39
      %s42 = ssub.s32 %s29, %s41
      %p43 = scmp.eq.s32.totalorder %s42, 0
      %s45 = sadd.s32 %s44, 1
      %s46 = scalar_select %p43, %s44, %s45
      %p49 = pneg %p43
      %p50 = scmp.eq.s32.totalorder %s22, 3
      %p51 = por %p49, %p50
      %p52 = scmp.ne.s32.totalorder %s44, %s47
      %p53 = scmp.eq.s32.totalorder %s22, 0
      %p54 = por %p52, %p53
      %p55 = scmp.ne.s32.totalorder %s44, %s47
      %p56 = scmp.eq.s32.totalorder %s27, 3
      %p57 = por %p55, %p56
      %p58 = scmp.ne.s32.totalorder %s47, %s48
      %p59 = scmp.eq.s32.totalorder %s27, 0
      %p60 = por %p58, %p59
      %p61 = scmp.ne.s32.totalorder %s47, %s48
      %p62 = scmp.eq.s32.totalorder %s28, 3
      %p63 = por %p61, %p62
      %p65 = scmp.ne.s32.totalorder %s48, %s64
      %p66 = scmp.eq.s32.totalorder %s28, 0
      %p67 = por %p65, %p66
      %s68 = ssub.s32 %s30, %s37
      %p69 = scmp.eq.s32.totalorder %s68, 0
      %s71 = sadd.s32 %s70, 1
      %s72 = scalar_select %p69, %s70, %s71
      %p75 = pneg %p69
      %p76 = scmp.eq.s32.totalorder %s22, 3
      %p77 = por %p75, %p76
      %p78 = scmp.ne.s32.totalorder %s70, %s73
      %p79 = scmp.eq.s32.totalorder %s22, 0
      %p80 = por %p78, %p79
      %p81 = scmp.ne.s32.totalorder %s70, %s73
      %p82 = scmp.eq.s32.totalorder %s27, 3
      %p83 = por %p81, %p82
      %p84 = scmp.ne.s32.totalorder %s73, %s74
      %p85 = scmp.eq.s32.totalorder %s27, 0
      %p86 = por %p84, %p85
      %p87 = scmp.ne.s32.totalorder %s73, %s74
      %p88 = scmp.eq.s32.totalorder %s28, 3
      %p89 = por %p87, %p88
      %p91 = scmp.ne.s32.totalorder %s74, %s90
      %p92 = scmp.eq.s32.totalorder %s28, 0
      %p93 = por %p91, %p92
      %s95 = sadd.s32 %s94, 1
      %p98 = scmp.eq.s32.totalorder %s22, 3
      %p99 = scmp.ne.s32.totalorder %s94, %s96
      %p100 = scmp.eq.s32.totalorder %s22, 0
      %p101 = por %p99, %p100
      %p102 = scmp.ne.s32.totalorder %s94, %s96
      %p103 = scmp.eq.s32.totalorder %s27, 3
      %p104 = por %p102, %p103
      %p105 = scmp.ne.s32.totalorder %s96, %s97
      %p106 = scmp.eq.s32.totalorder %s27, 0
      %p107 = por %p105, %p106
      %p108 = scmp.ne.s32.totalorder %s96, %s97
      %p109 = scmp.eq.s32.totalorder %s28, 3
      %p110 = por %p108, %p109
      %p112 = scmp.ne.s32.totalorder %s97, %s111
      %p113 = scmp.eq.s32.totalorder %s28, 0
      %p114 = por %p112, %p113
      %s116 = sadd.s32 %s115, 1
      %p119 = scmp.eq.s32.totalorder %s22, 3
      %p120 = scmp.ne.s32.totalorder %s115, %s117
      %p121 = scmp.eq.s32.totalorder %s22, 0
      %p122 = por %p120, %p121
      %p123 = scmp.ne.s32.totalorder %s115, %s117
      %p124 = scmp.eq.s32.totalorder %s27, 3
      %p125 = por %p123, %p124
      %p126 = scmp.ne.s32.totalorder %s117, %s118
      %p127 = scmp.eq.s32.totalorder %s27, 0
      %p128 = por %p126, %p127
      %p129 = scmp.ne.s32.totalorder %s117, %s118
      %p130 = scmp.eq.s32.totalorder %s28, 3
      %p131 = por %p129, %p130
      %p133 = scmp.ne.s32.totalorder %s118, %s132
      %p134 = scmp.eq.s32.totalorder %s28, 0
      %p135 = por %p133, %p134
      %s137 = sadd.s32 %s136, 1
      %p140 = scmp.eq.s32.totalorder %s22, 3
      %p141 = scmp.ne.s32.totalorder %s136, %s138
      %p142 = scmp.eq.s32.totalorder %s22, 0
      %p143 = por %p141, %p142
      %p144 = scmp.ne.s32.totalorder %s136, %s138
      %p145 = scmp.eq.s32.totalorder %s27, 3
      %p146 = por %p144, %p145
      %p147 = scmp.ne.s32.totalorder %s138, %s139
      %p148 = scmp.eq.s32.totalorder %s27, 0
      %p149 = por %p147, %p148
      %p150 = scmp.ne.s32.totalorder %s138, %s139
      %p151 = scmp.eq.s32.totalorder %s28, 3
      %p152 = por %p150, %p151
      %p154 = scmp.ne.s32.totalorder %s139, %s153
      %p155 = scmp.eq.s32.totalorder %s28, 0
      %p156 = por %p154, %p155
      %s157 = ssub.s32 %s29, %s41
      %s158 = ssub.s32 %s30, %s37
      %s159 = sor.u32 %s157, %s158
      %p160 = scmp.eq.s32.totalorder %s159, 0
      %s162 = sadd.s32 %s161, 1
      %s163 = scalar_select %p160, %s161, %s162
      %p166 = pneg %p160
      %p167 = scmp.eq.s32.totalorder %s22, 3
      %p168 = por %p166, %p167
      %p169 = scmp.ne.s32.totalorder %s161, %s164
      %p170 = scmp.eq.s32.totalorder %s22, 0
      %p171 = por %p169, %p170
      %p172 = scmp.ne.s32.totalorder %s161, %s164
      %p173 = scmp.eq.s32.totalorder %s27, 3
      %p174 = por %p172, %p173
      %p175 = scmp.ne.s32.totalorder %s164, %s165
      %p176 = scmp.eq.s32.totalorder %s27, 0
      %p177 = por %p175, %p176
      %p178 = scmp.ne.s32.totalorder %s164, %s165
      %p179 = scmp.eq.s32.totalorder %s28, 3
      %p180 = por %p178, %p179
      %p182 = scmp.ne.s32.totalorder %s165, %s181
      %p183 = scmp.eq.s32.totalorder %s28, 0
      %p184 = por %p182, %p183
      %s185 = ssub.s32 %s29, %s41
      %s186 = ssub.s32 %s30, %s37
      %s187 = sor.u32 %s185, %s186
      %p188 = scmp.eq.s32.totalorder %s187, 0
      %s190 = sadd.s32 %s189, 1
      %s191 = scalar_select %p188, %s189, %s190
      %p194 = pneg %p188
      %p195 = scmp.eq.s32.totalorder %s22, 3
      %p196 = por %p194, %p195
      %p197 = scmp.ne.s32.totalorder %s189, %s192
      %p198 = scmp.eq.s32.totalorder %s22, 0
      %p199 = por %p197, %p198
      %p200 = scmp.ne.s32.totalorder %s189, %s192
      %p201 = scmp.eq.s32.totalorder %s27, 3
      %p202 = por %p200, %p201
      %p203 = scmp.ne.s32.totalorder %s192, %s193
      %p204 = scmp.eq.s32.totalorder %s27, 0
      %p205 = por %p203, %p204
      %p206 = scmp.ne.s32.totalorder %s192, %s193
      %p207 = scmp.eq.s32.totalorder %s28, 3
      %p208 = por %p206, %p207
      %p210 = scmp.ne.s32.totalorder %s193, %s209
      %p211 = scmp.eq.s32.totalorder %s28, 0
      %p212 = por %p210, %p211
      %s213 = ssub.s32 %s29, %s41
      %p214 = scmp.eq.s32.totalorder %s213, 0
      %s216 = sadd.s32 %s215, 1
      %s217 = scalar_select %p214, %s215, %s216
      %p220 = pneg %p214
      %p221 = scmp.eq.s32.totalorder %s22, 3
      %p222 = por %p220, %p221
      %p223 = scmp.ne.s32.totalorder %s215, %s218
      %p224 = scmp.eq.s32.totalorder %s22, 0
      %p225 = por %p223, %p224
      %p226 = scmp.ne.s32.totalorder %s215, %s218
      %p227 = scmp.eq.s32.totalorder %s27, 3
      %p228 = por %p226, %p227
      %p229 = scmp.ne.s32.totalorder %s218, %s219
      %p230 = scmp.eq.s32.totalorder %s27, 0
      %p231 = por %p229, %p230
      %p232 = scmp.ne.s32.totalorder %s218, %s219
      %p233 = scmp.eq.s32.totalorder %s28, 3
      %p234 = por %p232, %p233
      %p236 = scmp.ne.s32.totalorder %s219, %s235
      %p237 = scmp.eq.s32.totalorder %s28, 0
      %p238 = por %p236, %p237
      %p239 = scmp.le.s32.totalorder 1, %s22
      %p240 = scmp.lt.s32.totalorder %s22, 5
      %p241 = pnand %p239, %p240
      %p242 = pneg %p241
      // Predicated region
      $region9: #{tpu_custom_call.1} parent=5 // pred_check
        _
      $region10: #{tpu_custom_call.1} parent=5 // pred_check_branch
        %244 = sbr.rel (%p241) target = $region12
      $region11: #{tpu_custom_call.1} parent=5 // pred_region
        %s245 = ssub.s32 %s22, 1
        // Predicated region
        $region13: #{tpu_custom_call.1} parent=11 // pred_check
          %p246 = pneg %p107
        $region14: #{tpu_custom_call.1} parent=11 // pred_check_branch
          %248 = sbr.rel (%p246) target = $region16
        $region15: #{tpu_custom_call.1} parent=11 // pred_region
          _
        $region16: #{tpu_custom_call.1} parent=11 // pred_fallthru
          _
        // Predicated region
        $region17: #{tpu_custom_call.1} parent=11 // pred_check
          %p249 = pneg %p128
        $region18: #{tpu_custom_call.1} parent=11 // pred_check_branch
          %251 = sbr.rel (%p249) target = $region20
        $region19: #{tpu_custom_call.1} parent=11 // pred_region
          _
        $region20: #{tpu_custom_call.1} parent=11 // pred_fallthru
          _
        // Predicated region
        $region21: #{tpu_custom_call.1} parent=11 // pred_check
          %p252 = pneg %p149
        $region22: #{tpu_custom_call.1} parent=11 // pred_check_branch
          %254 = sbr.rel (%p252) target = $region24
        $region23: #{tpu_custom_call.1} parent=11 // pred_region
          _
        $region24: #{tpu_custom_call.1} parent=11 // pred_fallthru
          _
      $region12: #{tpu_custom_call.1} parent=5 // pred_fallthru
        _
      %p255 = scmp.lt.s32.totalorder %s22, 4
      // Predicated region
      $region25: #{tpu_custom_call.1} parent=5 // pred_check
        %p256 = pneg %p255
      $region26: #{tpu_custom_call.1} parent=5 // pred_check_branch
        %258 = sbr.rel (%p256) target = $region28
      $region27: #{tpu_custom_call.1} parent=5 // pred_region
        // Predicated region
        $region29: #{tpu_custom_call.1} parent=27 // pred_check
          %p259 = pneg %p54
        $region30: #{tpu_custom_call.1} parent=27 // pred_check_branch
          %261 = sbr.rel (%p259) target = $region32
        $region31: #{tpu_custom_call.1} parent=27 // pred_region
          %s262 = smul.u32 16, %s29
          %p263 = scmp.lt.s32.totalorder %s262, 31
          %s264 = scalar_select %p263, %s262, 31
          %s265 = smul.addr %s264, 8
          %s266 = scalar_lea.vmem %s1, %s265
          %s267 = smul.u32 16, %s29
        $region32: #{tpu_custom_call.1} parent=27 // pred_fallthru
          _
        // Predicated region
        $region33: #{tpu_custom_call.1} parent=27 // pred_check
          %p268 = pneg %p80
        $region34: #{tpu_custom_call.1} parent=27 // pred_check_branch
          %270 = sbr.rel (%p268) target = $region36
        $region35: #{tpu_custom_call.1} parent=27 // pred_region
          %s271 = smul.u32 16, %s30
          %p272 = scmp.lt.s32.totalorder %s271, 31
          %s273 = scalar_select %p272, %s271, 31
          %s274 = smul.addr %s273, 8
          %s275 = scalar_lea.vmem %s2, %s274
          %s276 = smul.u32 16, %s30
        $region36: #{tpu_custom_call.1} parent=27 // pred_fallthru
          _
        // Predicated region
        $region37: #{tpu_custom_call.1} parent=27 // pred_check
          %p277 = pneg %p171
        $region38: #{tpu_custom_call.1} parent=27 // pred_check_branch
          %279 = sbr.rel (%p277) target = $region40
        $region39: #{tpu_custom_call.1} parent=27 // pred_region
          %s280 = sand.u32 %s161, 1
          %s281 = sand.u32 %s161, 1
          %s282 = smul.addr %s281, 64
          %s283 = scalar_lea.vmem [#allocation11], %s282
          %s284 = smul.u32 16, %s29
          %s285 = smul.addr %s284, 2
          %s286 = sadd.s32 %s30, %s285
          %s287 = smul.addr %s286, 4
          %s288 = scalar_lea.vmem %s6, %s287
          // Predicated region
          $region41: #{tpu_custom_call.1} parent=39 // pred_check
            _
          $region42: #{tpu_custom_call.1} parent=39 // pred_check_branch
            %290 = sbr.rel (0) target = $region44
          $region43: #{tpu_custom_call.1} parent=39 // pred_region
            // Predicated region
            $region45: #{tpu_custom_call.1} parent=43 // pred_check
              _
            $region46: #{tpu_custom_call.1} parent=43 // pred_check_branch
              %292 = sbr.rel target = $region48
            $region47: #{tpu_custom_call.1} parent=43 // pred_region
              // Predicated region
              $region60: #{tpu_custom_call.1} parent=47 // pred_check
                _
              $region61: #{tpu_custom_call.1} parent=47 // pred_check_branch
                %338 = sbr.rel (0) target = $region63
              $region62: #{tpu_custom_call.1} parent=47 // pred_region
                loop: start=0, step=1, limit=1
                $region64: #{tpu_custom_call.1} parent=62 // loop_pre_header
                  _
                $region65: #{tpu_custom_call.1} parent=62 // loop_header
                  %s340 = sphi 0, %s344
                  %p341 = scmp.ge.s32.totalorder %s340, 1
                  %s345 = sphi %s288, %s288
                  %s346 = sphi %s283, %s283
                $region66: #{tpu_custom_call.1} parent=62 // loop_header_branch
                  %343 = sbr.rel (%p341) target = $region70
                $region67: #{tpu_custom_call.1} parent=62 // loop_body
                  _
                $region68: #{tpu_custom_call.1} parent=62 // loop_footer
                  %s344 = sadd.s32 1, %s340
                $region69: #{tpu_custom_call.1} parent=62 // loop_footer_branch
                  %339 = sbr.rel target = $region65
                $region70: #{tpu_custom_call.1} parent=62 // loop_exit
                  _
                %s348 = ssub.s32 16, 1
                loop: start=0, step=1, limit=1
                $region71: #{tpu_custom_call.1} parent=62 // loop_pre_header
                  _
                $region72: #{tpu_custom_call.1} parent=62 // loop_header
                  %s350 = sphi 0, %s354
                  %p351 = scmp.ge.s32.totalorder %s350, 1
                  %s355 = sphi %s288, %s288
                  %s356 = sphi %s283, %s283
                $region73: #{tpu_custom_call.1} parent=62 // loop_header_branch
                  %353 = sbr.rel (%p351) target = $region77
                $region74: #{tpu_custom_call.1} parent=62 // loop_body
                  %v357 = vld [vmem:[%s355] sm:%s348]
                  %358 = vst [vmem:[%s356] sm:%s348] %v357
                  %v359 = vld [vmem:[%s355 + $0x8] sm:%s348]
                  %360 = vst [vmem:[%s356 + $0x4] sm:%s348] %v359
                  %v361 = vld [vmem:[%s355 + $0x10] sm:%s348]
                  %362 = vst [vmem:[%s356 + $0x8] sm:%s348] %v361
                  %v363 = vld [vmem:[%s355 + $0x18] sm:%s348]
                  %364 = vst [vmem:[%s356 + $0xc] sm:%s348] %v363
                  %v365 = vld [vmem:[%s355 + $0x20] sm:%s348]
                  %366 = vst [vmem:[%s356 + $0x10] sm:%s348] %v365
                  %v367 = vld [vmem:[%s355 + $0x28] sm:%s348]
                  %368 = vst [vmem:[%s356 + $0x14] sm:%s348] %v367
                  %v369 = vld [vmem:[%s355 + $0x30] sm:%s348]
                  %370 = vst [vmem:[%s356 + $0x18] sm:%s348] %v369
                  %v371 = vld [vmem:[%s355 + $0x38] sm:%s348]
                  %372 = vst [vmem:[%s356 + $0x1c] sm:%s348] %v371
                  %v373 = vld [vmem:[%s355 + $0x40] sm:%s348]
                  %374 = vst [vmem:[%s356 + $0x20] sm:%s348] %v373
                  %v375 = vld [vmem:[%s355 + $0x48] sm:%s348]
                  %376 = vst [vmem:[%s356 + $0x24] sm:%s348] %v375
                  %v377 = vld [vmem:[%s355 + $0x50] sm:%s348]
                  %378 = vst [vmem:[%s356 + $0x28] sm:%s348] %v377
                  %v379 = vld [vmem:[%s355 + $0x58] sm:%s348]
                  %380 = vst [vmem:[%s356 + $0x2c] sm:%s348] %v379
                  %v381 = vld [vmem:[%s355 + $0x60] sm:%s348]
                  %382 = vst [vmem:[%s356 + $0x30] sm:%s348] %v381
                  %v383 = vld [vmem:[%s355 + $0x68] sm:%s348]
                  %384 = vst [vmem:[%s356 + $0x34] sm:%s348] %v383
                  %v385 = vld [vmem:[%s355 + $0x70] sm:%s348]
                  %386 = vst [vmem:[%s356 + $0x38] sm:%s348] %v385
                  %v387 = vld [vmem:[%s355 + $0x78] sm:%s348]
                  %388 = vst [vmem:[%s356 + $0x3c] sm:%s348] %v387
                $region75: #{tpu_custom_call.1} parent=62 // loop_footer
                  %s354 = sadd.s32 1, %s350
                $region76: #{tpu_custom_call.1} parent=62 // loop_footer_branch
                  %349 = sbr.rel target = $region72
                $region77: #{tpu_custom_call.1} parent=62 // loop_exit
                  _
              $region63: #{tpu_custom_call.1} parent=47 // pred_fallthru
                _
            $region48: #{tpu_custom_call.1} parent=43 // pred_fallthru
              _
            // Predicated region
            $region49: #{tpu_custom_call.1} parent=43 // pred_check
              _
            $region50: #{tpu_custom_call.1} parent=43 // pred_check_branch
              %294 = sbr.rel (0) target = $region52
            $region51: #{tpu_custom_call.1} parent=43 // pred_region
              %s296 = ssub.s32 16, 1
              loop: start=0, step=1, limit=1
              $region53: #{tpu_custom_call.1} parent=51 // loop_pre_header
                _
              $region54: #{tpu_custom_call.1} parent=51 // loop_header
                %s298 = sphi 0, %s302
                %p299 = scmp.ge.s32.totalorder %s298, 1
                %s303 = sphi %s288, %s288
                %s304 = sphi %s283, %s283
              $region55: #{tpu_custom_call.1} parent=51 // loop_header_branch
                %301 = sbr.rel (%p299) target = $region59
              $region56: #{tpu_custom_call.1} parent=51 // loop_body
                %v305 = vld [vmem:[%s303] sm:%s296]
                %306 = vst [vmem:[%s304] sm:%s296] %v305
                %v307 = vld [vmem:[%s303 + $0x8] sm:%s296]
                %308 = vst [vmem:[%s304 + $0x4] sm:%s296] %v307
                %v309 = vld [vmem:[%s303 + $0x10] sm:%s296]
                %310 = vst [vmem:[%s304 + $0x8] sm:%s296] %v309
                %v311 = vld [vmem:[%s303 + $0x18] sm:%s296]
                %312 = vst [vmem:[%s304 + $0xc] sm:%s296] %v311
                %v313 = vld [vmem:[%s303 + $0x20] sm:%s296]
                %314 = vst [vmem:[%s304 + $0x10] sm:%s296] %v313
                %v315 = vld [vmem:[%s303 + $0x28] sm:%s296]
                %316 = vst [vmem:[%s304 + $0x14] sm:%s296] %v315
                %v317 = vld [vmem:[%s303 + $0x30] sm:%s296]
                %318 = vst [vmem:[%s304 + $0x18] sm:%s296] %v317
                %v319 = vld [vmem:[%s303 + $0x38] sm:%s296]
                %320 = vst [vmem:[%s304 + $0x1c] sm:%s296] %v319
                %v321 = vld [vmem:[%s303 + $0x40] sm:%s296]
                %322 = vst [vmem:[%s304 + $0x20] sm:%s296] %v321
                %v323 = vld [vmem:[%s303 + $0x48] sm:%s296]
                %324 = vst [vmem:[%s304 + $0x24] sm:%s296] %v323
                %v325 = vld [vmem:[%s303 + $0x50] sm:%s296]
                %326 = vst [vmem:[%s304 + $0x28] sm:%s296] %v325
                %v327 = vld [vmem:[%s303 + $0x58] sm:%s296]
                %328 = vst [vmem:[%s304 + $0x2c] sm:%s296] %v327
                %v329 = vld [vmem:[%s303 + $0x60] sm:%s296]
                %330 = vst [vmem:[%s304 + $0x30] sm:%s296] %v329
                %v331 = vld [vmem:[%s303 + $0x68] sm:%s296]
                %332 = vst [vmem:[%s304 + $0x34] sm:%s296] %v331
                %v333 = vld [vmem:[%s303 + $0x70] sm:%s296]
                %334 = vst [vmem:[%s304 + $0x38] sm:%s296] %v333
                %v335 = vld [vmem:[%s303 + $0x78] sm:%s296]
                %336 = vst [vmem:[%s304 + $0x3c] sm:%s296] %v335
              $region57: #{tpu_custom_call.1} parent=51 // loop_footer
                %s302 = sadd.s32 1, %s298
              $region58: #{tpu_custom_call.1} parent=51 // loop_footer_branch
                %297 = sbr.rel target = $region54
              $region59: #{tpu_custom_call.1} parent=51 // loop_exit
                _
            $region52: #{tpu_custom_call.1} parent=43 // pred_fallthru
              _
          $region44: #{tpu_custom_call.1} parent=39 // pred_fallthru
            _
          %389 = vnop
        $region40: #{tpu_custom_call.1} parent=27 // pred_fallthru
          _
        // Predicated region
        $region78: #{tpu_custom_call.1} parent=27 // pred_check
          %p390 = pneg %p199
        $region79: #{tpu_custom_call.1} parent=27 // pred_check_branch
          %392 = sbr.rel (%p390) target = $region81
        $region80: #{tpu_custom_call.1} parent=27 // pred_region
          %s393 = sand.u32 %s189, 1
          %s394 = sand.u32 %s189, 1
          %s395 = smul.addr %s394, 64
          %s396 = scalar_lea.vmem [#allocation12], %s395
          %s397 = smul.u32 16, %s29
          %s398 = smul.addr %s397, 2
          %s399 = sadd.s32 %s30, %s398
          %s400 = smul.addr %s399, 4
          %s401 = scalar_lea.vmem %s7, %s400
          // Predicated region
          $region82: #{tpu_custom_call.1} parent=80 // pred_check
            _
          $region83: #{tpu_custom_call.1} parent=80 // pred_check_branch
            %403 = sbr.rel (0) target = $region85
          $region84: #{tpu_custom_call.1} parent=80 // pred_region
            // Predicated region
            $region86: #{tpu_custom_call.1} parent=84 // pred_check
              _
            $region87: #{tpu_custom_call.1} parent=84 // pred_check_branch
              %405 = sbr.rel target = $region89
            $region88: #{tpu_custom_call.1} parent=84 // pred_region
              // Predicated region
              $region101: #{tpu_custom_call.1} parent=88 // pred_check
                _
              $region102: #{tpu_custom_call.1} parent=88 // pred_check_branch
                %451 = sbr.rel (0) target = $region104
              $region103: #{tpu_custom_call.1} parent=88 // pred_region
                loop: start=0, step=1, limit=1
                $region105: #{tpu_custom_call.1} parent=103 // loop_pre_header
                  _
                $region106: #{tpu_custom_call.1} parent=103 // loop_header
                  %s453 = sphi 0, %s457
                  %p454 = scmp.ge.s32.totalorder %s453, 1
                  %s458 = sphi %s401, %s401
                  %s459 = sphi %s396, %s396
                $region107: #{tpu_custom_call.1} parent=103 // loop_header_branch
                  %456 = sbr.rel (%p454) target = $region111
                $region108: #{tpu_custom_call.1} parent=103 // loop_body
                  _
                $region109: #{tpu_custom_call.1} parent=103 // loop_footer
                  %s457 = sadd.s32 1, %s453
                $region110: #{tpu_custom_call.1} parent=103 // loop_footer_branch
                  %452 = sbr.rel target = $region106
                $region111: #{tpu_custom_call.1} parent=103 // loop_exit
                  _
                %s461 = ssub.s32 16, 1
                loop: start=0, step=1, limit=1
                $region112: #{tpu_custom_call.1} parent=103 // loop_pre_header
                  _
                $region113: #{tpu_custom_call.1} parent=103 // loop_header
                  %s463 = sphi 0, %s467
                  %p464 = scmp.ge.s32.totalorder %s463, 1
                  %s468 = sphi %s401, %s401
                  %s469 = sphi %s396, %s396
                $region114: #{tpu_custom_call.1} parent=103 // loop_header_branch
                  %466 = sbr.rel (%p464) target = $region118
                $region115: #{tpu_custom_call.1} parent=103 // loop_body
                  %v470 = vld [vmem:[%s468] sm:%s461]
                  %471 = vst [vmem:[%s469] sm:%s461] %v470
                  %v472 = vld [vmem:[%s468 + $0x8] sm:%s461]
                  %473 = vst [vmem:[%s469 + $0x4] sm:%s461] %v472
                  %v474 = vld [vmem:[%s468 + $0x10] sm:%s461]
                  %475 = vst [vmem:[%s469 + $0x8] sm:%s461] %v474
                  %v476 = vld [vmem:[%s468 + $0x18] sm:%s461]
                  %477 = vst [vmem:[%s469 + $0xc] sm:%s461] %v476
                  %v478 = vld [vmem:[%s468 + $0x20] sm:%s461]
                  %479 = vst [vmem:[%s469 + $0x10] sm:%s461] %v478
                  %v480 = vld [vmem:[%s468 + $0x28] sm:%s461]
                  %481 = vst [vmem:[%s469 + $0x14] sm:%s461] %v480
                  %v482 = vld [vmem:[%s468 + $0x30] sm:%s461]
                  %483 = vst [vmem:[%s469 + $0x18] sm:%s461] %v482
                  %v484 = vld [vmem:[%s468 + $0x38] sm:%s461]
                  %485 = vst [vmem:[%s469 + $0x1c] sm:%s461] %v484
                  %v486 = vld [vmem:[%s468 + $0x40] sm:%s461]
                  %487 = vst [vmem:[%s469 + $0x20] sm:%s461] %v486
                  %v488 = vld [vmem:[%s468 + $0x48] sm:%s461]
                  %489 = vst [vmem:[%s469 + $0x24] sm:%s461] %v488
                  %v490 = vld [vmem:[%s468 + $0x50] sm:%s461]
                  %491 = vst [vmem:[%s469 + $0x28] sm:%s461] %v490
                  %v492 = vld [vmem:[%s468 + $0x58] sm:%s461]
                  %493 = vst [vmem:[%s469 + $0x2c] sm:%s461] %v492
                  %v494 = vld [vmem:[%s468 + $0x60] sm:%s461]
                  %495 = vst [vmem:[%s469 + $0x30] sm:%s461] %v494
                  %v496 = vld [vmem:[%s468 + $0x68] sm:%s461]
                  %497 = vst [vmem:[%s469 + $0x34] sm:%s461] %v496
                  %v498 = vld [vmem:[%s468 + $0x70] sm:%s461]
                  %499 = vst [vmem:[%s469 + $0x38] sm:%s461] %v498
                  %v500 = vld [vmem:[%s468 + $0x78] sm:%s461]
                  %501 = vst [vmem:[%s469 + $0x3c] sm:%s461] %v500
                $region116: #{tpu_custom_call.1} parent=103 // loop_footer
                  %s467 = sadd.s32 1, %s463
                $region117: #{tpu_custom_call.1} parent=103 // loop_footer_branch
                  %462 = sbr.rel target = $region113
                $region118: #{tpu_custom_call.1} parent=103 // loop_exit
                  _
              $region104: #{tpu_custom_call.1} parent=88 // pred_fallthru
                _
            $region89: #{tpu_custom_call.1} parent=84 // pred_fallthru
              _
            // Predicated region
            $region90: #{tpu_custom_call.1} parent=84 // pred_check
              _
            $region91: #{tpu_custom_call.1} parent=84 // pred_check_branch
              %407 = sbr.rel (0) target = $region93
            $region92: #{tpu_custom_call.1} parent=84 // pred_region
              %s409 = ssub.s32 16, 1
              loop: start=0, step=1, limit=1
              $region94: #{tpu_custom_call.1} parent=92 // loop_pre_header
                _
              $region95: #{tpu_custom_call.1} parent=92 // loop_header
                %s411 = sphi 0, %s415
                %p412 = scmp.ge.s32.totalorder %s411, 1
                %s416 = sphi %s401, %s401
                %s417 = sphi %s396, %s396
              $region96: #{tpu_custom_call.1} parent=92 // loop_header_branch
                %414 = sbr.rel (%p412) target = $region100
              $region97: #{tpu_custom_call.1} parent=92 // loop_body
                %v418 = vld [vmem:[%s416] sm:%s409]
                %419 = vst [vmem:[%s417] sm:%s409] %v418
                %v420 = vld [vmem:[%s416 + $0x8] sm:%s409]
                %421 = vst [vmem:[%s417 + $0x4] sm:%s409] %v420
                %v422 = vld [vmem:[%s416 + $0x10] sm:%s409]
                %423 = vst [vmem:[%s417 + $0x8] sm:%s409] %v422
                %v424 = vld [vmem:[%s416 + $0x18] sm:%s409]
                %425 = vst [vmem:[%s417 + $0xc] sm:%s409] %v424
                %v426 = vld [vmem:[%s416 + $0x20] sm:%s409]
                %427 = vst [vmem:[%s417 + $0x10] sm:%s409] %v426
                %v428 = vld [vmem:[%s416 + $0x28] sm:%s409]
                %429 = vst [vmem:[%s417 + $0x14] sm:%s409] %v428
                %v430 = vld [vmem:[%s416 + $0x30] sm:%s409]
                %431 = vst [vmem:[%s417 + $0x18] sm:%s409] %v430
                %v432 = vld [vmem:[%s416 + $0x38] sm:%s409]
                %433 = vst [vmem:[%s417 + $0x1c] sm:%s409] %v432
                %v434 = vld [vmem:[%s416 + $0x40] sm:%s409]
                %435 = vst [vmem:[%s417 + $0x20] sm:%s409] %v434
                %v436 = vld [vmem:[%s416 + $0x48] sm:%s409]
                %437 = vst [vmem:[%s417 + $0x24] sm:%s409] %v436
                %v438 = vld [vmem:[%s416 + $0x50] sm:%s409]
                %439 = vst [vmem:[%s417 + $0x28] sm:%s409] %v438
                %v440 = vld [vmem:[%s416 + $0x58] sm:%s409]
                %441 = vst [vmem:[%s417 + $0x2c] sm:%s409] %v440
                %v442 = vld [vmem:[%s416 + $0x60] sm:%s409]
                %443 = vst [vmem:[%s417 + $0x30] sm:%s409] %v442
                %v444 = vld [vmem:[%s416 + $0x68] sm:%s409]
                %445 = vst [vmem:[%s417 + $0x34] sm:%s409] %v444
                %v446 = vld [vmem:[%s416 + $0x70] sm:%s409]
                %447 = vst [vmem:[%s417 + $0x38] sm:%s409] %v446
                %v448 = vld [vmem:[%s416 + $0x78] sm:%s409]
                %449 = vst [vmem:[%s417 + $0x3c] sm:%s409] %v448
              $region98: #{tpu_custom_call.1} parent=92 // loop_footer
                %s415 = sadd.s32 1, %s411
              $region99: #{tpu_custom_call.1} parent=92 // loop_footer_branch
                %410 = sbr.rel target = $region95
              $region100: #{tpu_custom_call.1} parent=92 // loop_exit
                _
            $region93: #{tpu_custom_call.1} parent=84 // pred_fallthru
              _
          $region85: #{tpu_custom_call.1} parent=80 // pred_fallthru
            _
          %502 = vnop
        $region81: #{tpu_custom_call.1} parent=27 // pred_fallthru
          _
      $region28: #{tpu_custom_call.1} parent=5 // pred_fallthru
        _
      %p503 = scmp.le.s32.totalorder 1, %s22
      %p504 = scmp.lt.s32.totalorder %s22, 5
      %p505 = pnand %p503, %p504
      %p506 = pneg %p505
      // Predicated region
      $region119: #{tpu_custom_call.1} parent=5 // pred_check
        _
      $region120: #{tpu_custom_call.1} parent=5 // pred_check_branch
        %508 = sbr.rel (%p505) target = $region122
      $region121: #{tpu_custom_call.1} parent=5 // pred_region
        %s509 = ssub.s32 %s22, 1
        %s510 = sand.u32 %s164, 1
        %s511 = sand.u32 %s164, 1
        %s512 = smul.addr %s511, 64
        %s513 = scalar_lea.vmem [#allocation11], %s512
        // Predicated region
        $region123: #{tpu_custom_call.1} parent=121 // pred_check
          %p514 = pneg %p177
        $region124: #{tpu_custom_call.1} parent=121 // pred_check_branch
          %516 = sbr.rel (%p514) target = $region126
        $region125: #{tpu_custom_call.1} parent=121 // pred_region
          _
        $region126: #{tpu_custom_call.1} parent=121 // pred_fallthru
          _
        %s517 = sand.u32 %s192, 1
        %s518 = sand.u32 %s192, 1
        %s519 = smul.addr %s518, 64
        %s520 = scalar_lea.vmem [#allocation12], %s519
        // Predicated region
        $region127: #{tpu_custom_call.1} parent=121 // pred_check
          %p521 = pneg %p205
        $region128: #{tpu_custom_call.1} parent=121 // pred_check_branch
          %523 = sbr.rel (%p521) target = $region130
        $region129: #{tpu_custom_call.1} parent=121 // pred_region
          _
        $region130: #{tpu_custom_call.1} parent=121 // pred_fallthru
          _
        %s524 = smul.u32 16, %s31
        %p525 = scmp.lt.s32.totalorder %s524, 31
        %s526 = scalar_select %p525, %s524, 31
        %s527 = smul.addr %s526, 8
        %s528 = scalar_lea.vmem %s1, %s527
        %p529 = pneg %p60
        %p530 = pneg %p57
        %s531 = smul.u32 16, %s32
        %p532 = scmp.lt.s32.totalorder %s531, 31
        %s533 = scalar_select %p532, %s531, 31
        %s534 = smul.addr %s533, 8
        %s535 = scalar_lea.vmem %s2, %s534
        %p536 = pneg %p86
        %p537 = pneg %p83
        %p538 = pneg %p107
        %p539 = pneg %p104
        %p540 = pneg %p128
        %p541 = pneg %p125
        %p542 = pneg %p149
        %p543 = pneg %p146
        %s544 = sand.u32 %s164, 1
        %s545 = sand.u32 %s164, 1
        %s546 = smul.addr %s545, 64
        %s547 = scalar_lea.vmem [#allocation11], %s546
        %p548 = pneg %p177
        %p549 = pneg %p174
        %s550 = sand.u32 %s192, 1
        %s551 = sand.u32 %s192, 1
        %s552 = smul.addr %s551, 64
        %s553 = scalar_lea.vmem [#allocation12], %s552
        %p554 = pneg %p205
        %p555 = pneg %p202
        %p556 = pneg %p231
        %p557 = pneg %p228
        %s558 = smul.u32 16, %s31
        %p559 = scmp.lt.s32.totalorder %s558, 31
        %s560 = scalar_select %p559, %s558, 31
        %s561 = smul.addr %s560, 8
        %s562 = scalar_lea.vmem %s8, %s561
        %s563 = smul.u32 16, %s31
        %p564 = scmp.lt.s32.totalorder %s563, 31
        %s565 = scalar_select %p564, %s563, 31
        %s566 = smul.addr %s565, 8
        %s567 = scalar_lea.vmem %s1, %s566
        %s568 = smul.u32 16, %s31
        %s569 = smul.u32 16, %s32
        %p570 = scmp.lt.s32.totalorder %s569, 31
        %s571 = scalar_select %p570, %s569, 31
        %s572 = smul.addr %s571, 8
        %s573 = scalar_lea.vmem %s2, %s572
        %s574 = smul.u32 16, %s32
        %s575 = smul.u32 16, %s31
        %s576 = smul.u32 16, %s31
        %s577 = smul.u32 16, %s31
        %p578 = scmp.lt.s32.totalorder %s577, 31
        %s579 = scalar_select %p578, %s577, 31
        %s580 = smul.addr %s579, 8
        %s581 = scalar_lea.vmem %s8, %s580
        %s582 = smul.u32 16, %s31
        %p584 = scmp.eq.s32.totalorder %s32, 0
        // Predicated region
        $region131: #{tpu_custom_call.1} parent=121 // pred_check
          %p585 = pneg %p584
        $region132: #{tpu_custom_call.1} parent=121 // pred_check_branch
          %587 = sbr.rel (%p585) target = $region134
        $region133: #{tpu_custom_call.1} parent=121 // pred_region
          %vm588 = vcmask 7168
          %589 = vst.msk [vmem:[#allocation2] sm:$0xff] %vm588, -1e+30
          %590 = vst.msk [vmem:[#allocation2 + $0x8] sm:$0xff] %vm588, -1e+30
          %591 = vst.msk [vmem:[#allocation2 + $0x10] sm:$0xff] %vm588, -1e+30
          %592 = vst.msk [vmem:[#allocation2 + $0x18] sm:$0xff] %vm588, -1e+30
          %593 = vst.msk [vmem:[#allocation2 + $0x20] sm:$0xff] %vm588, -1e+30
          %594 = vst.msk [vmem:[#allocation2 + $0x28] sm:$0xff] %vm588, -1e+30
          %595 = vst.msk [vmem:[#allocation2 + $0x30] sm:$0xff] %vm588, -1e+30
          %596 = vst.msk [vmem:[#allocation2 + $0x38] sm:$0xff] %vm588, -1e+30
          %597 = vst.msk [vmem:[#allocation2 + $0x40] sm:$0xff] %vm588, -1e+30
          %598 = vst.msk [vmem:[#allocation2 + $0x48] sm:$0xff] %vm588, -1e+30
          %599 = vst.msk [vmem:[#allocation2 + $0x50] sm:$0xff] %vm588, -1e+30
          %600 = vst.msk [vmem:[#allocation2 + $0x58] sm:$0xff] %vm588, -1e+30
          %601 = vst.msk [vmem:[#allocation2 + $0x60] sm:$0xff] %vm588, -1e+30
          %602 = vst.msk [vmem:[#allocation2 + $0x68] sm:$0xff] %vm588, -1e+30
          %603 = vst.msk [vmem:[#allocation2 + $0x70] sm:$0xff] %vm588, -1e+30
          %604 = vst.msk [vmem:[#allocation2 + $0x78] sm:$0xff] %vm588, -1e+30
          %605 = vst.msk [vmem:[#allocation3] sm:$0xff] %vm588, 0.0
          %606 = vst.msk [vmem:[#allocation3 + $0x8] sm:$0xff] %vm588, 0.0
          %607 = vst.msk [vmem:[#allocation3 + $0x10] sm:$0xff] %vm588, 0.0
          %608 = vst.msk [vmem:[#allocation3 + $0x18] sm:$0xff] %vm588, 0.0
          %609 = vst.msk [vmem:[#allocation3 + $0x20] sm:$0xff] %vm588, 0.0
          %610 = vst.msk [vmem:[#allocation3 + $0x28] sm:$0xff] %vm588, 0.0
          %611 = vst.msk [vmem:[#allocation3 + $0x30] sm:$0xff] %vm588, 0.0
          %612 = vst.msk [vmem:[#allocation3 + $0x38] sm:$0xff] %vm588, 0.0
          %613 = vst.msk [vmem:[#allocation3 + $0x40] sm:$0xff] %vm588, 0.0
          %614 = vst.msk [vmem:[#allocation3 + $0x48] sm:$0xff] %vm588, 0.0
          %615 = vst.msk [vmem:[#allocation3 + $0x50] sm:$0xff] %vm588, 0.0
          %616 = vst.msk [vmem:[#allocation3 + $0x58] sm:$0xff] %vm588, 0.0
          %617 = vst.msk [vmem:[#allocation3 + $0x60] sm:$0xff] %vm588, 0.0
          %618 = vst.msk [vmem:[#allocation3 + $0x68] sm:$0xff] %vm588, 0.0
          %619 = vst.msk [vmem:[#allocation3 + $0x70] sm:$0xff] %vm588, 0.0
          %620 = vst.msk [vmem:[#allocation3 + $0x78] sm:$0xff] %vm588, 0.0
          %vm621 = vcmask 261120
          %622 = vst.msk [vmem:[#allocation4] sm:$0xff] %vm621, 0.0
          %623 = vst.msk [vmem:[#allocation4 + $0x8] sm:$0xff] %vm621, 0.0
          %624 = vst.msk [vmem:[#allocation4 + $0x10] sm:$0xff] %vm621, 0.0
          %625 = vst.msk [vmem:[#allocation4 + $0x18] sm:$0xff] %vm621, 0.0
          %626 = vst.msk [vmem:[#allocation4 + $0x20] sm:$0xff] %vm621, 0.0
          %627 = vst.msk [vmem:[#allocation4 + $0x28] sm:$0xff] %vm621, 0.0
          %628 = vst.msk [vmem:[#allocation4 + $0x30] sm:$0xff] %vm621, 0.0
          %629 = vst.msk [vmem:[#allocation4 + $0x38] sm:$0xff] %vm621, 0.0
          %630 = vst.msk [vmem:[#allocation4 + $0x40] sm:$0xff] %vm621, 0.0
          %631 = vst.msk [vmem:[#allocation4 + $0x48] sm:$0xff] %vm621, 0.0
          %632 = vst.msk [vmem:[#allocation4 + $0x50] sm:$0xff] %vm621, 0.0
          %633 = vst.msk [vmem:[#allocation4 + $0x58] sm:$0xff] %vm621, 0.0
          %634 = vst.msk [vmem:[#allocation4 + $0x60] sm:$0xff] %vm621, 0.0
          %635 = vst.msk [vmem:[#allocation4 + $0x68] sm:$0xff] %vm621, 0.0
          %636 = vst.msk [vmem:[#allocation4 + $0x70] sm:$0xff] %vm621, 0.0
          %637 = vst.msk [vmem:[#allocation4 + $0x78] sm:$0xff] %vm621, 0.0
          %v638 = vld [vmem:[%s3] sm:$0xff]
          %v639 = vpack.c.bf16 %v638, %v638
          %v640 = vld [vmem:[%s567] sm:$0xff]
          %v641 = vld [vmem:[%s567 + $0x8] sm:$0xff]
          %v642 = vld [vmem:[%s567 + $0x10] sm:$0xff]
          %v643 = vld [vmem:[%s567 + $0x18] sm:$0xff]
          %v644 = vld [vmem:[%s567 + $0x20] sm:$0xff]
          %v645 = vld [vmem:[%s567 + $0x28] sm:$0xff]
          %v646 = vld [vmem:[%s567 + $0x30] sm:$0xff]
          %v647 = vld [vmem:[%s567 + $0x38] sm:$0xff]
          %v648 = vld [vmem:[%s567 + $0x40] sm:$0xff]
          %v649 = vld [vmem:[%s567 + $0x48] sm:$0xff]
          %v650 = vld [vmem:[%s567 + $0x50] sm:$0xff]
          %v651 = vld [vmem:[%s567 + $0x58] sm:$0xff]
          %v652 = vld [vmem:[%s567 + $0x60] sm:$0xff]
          %v653 = vld [vmem:[%s567 + $0x68] sm:$0xff]
          %v654 = vld [vmem:[%s567 + $0x70] sm:$0xff]
          %v655 = vld [vmem:[%s567 + $0x78] sm:$0xff]
          %v656 = vpack.c.bf16 %v641, %v640
          %v657 = vpack.c.bf16 %v643, %v642
          %v658 = vpack.c.bf16 %v645, %v644
          %v659 = vpack.c.bf16 %v647, %v646
          %v660 = vpack.c.bf16 %v649, %v648
          %v661 = vpack.c.bf16 %v651, %v650
          %v662 = vpack.c.bf16 %v653, %v652
          %v663 = vpack.c.bf16 %v655, %v654
          %v664 = vld [vmem:[%s4] sm:$0x1]
          %v666 = vperm.slane %v664, 0
          %vm668 = vcmask 64512
          %v670 = vsel %vm668, %v656, 0
          %v673 = vsel %vm668, %v657, 0
          %v676 = vsel %vm668, %v658, 0
          %v679 = vsel %vm668, %v659, 0
          %v682 = vsel %vm668, %v660, 0
          %v685 = vsel %vm668, %v661, 0
          %v688 = vsel %vm668, %v662, 0
          %v691 = vsel %vm668, %v663, 0
          %vm693 = vcmask 1043456
          %v695 = vsel %vm693, %v639, 0
          %697 = vmatpush.bf16.msra.mxu0 0
          %698 = vmatpush.bf16.msra.mxu0 0
          %699 = vmatpush.bf16.msra.mxu0 0
          %700 = vmatpush.bf16.msra.mxu0 0
          %701 = vmatpush.bf16.msra.mxu0 0
          %702 = vmatpush.bf16.msra.mxu0 0
          %703 = vmatpush.bf16.msra.mxu0 0
          %704 = vmatpush.bf16.msra.mxu0 %v695
          %705 = vmatmul.bf16.gmra.mxu0 %v670
          %v706 = vpop.f32.mrf.mxu0
          %v707 = vadd.f32 %v666, %v706
          %v708 = vpop.f32.mrf.mxu0
          %v709 = vadd.f32 %v666, %v708
          %710 = vmatmul.bf16.gmra.mxu0 %v673
          %v711 = vpop.f32.mrf.mxu0
          %v712 = vadd.f32 %v666, %v711
          %v713 = vpop.f32.mrf.mxu0
          %v714 = vadd.f32 %v666, %v713
          %715 = vmatmul.bf16.gmra.mxu0 %v676
          %v716 = vpop.f32.mrf.mxu0
          %v717 = vadd.f32 %v666, %v716
          %v718 = vpop.f32.mrf.mxu0
          %v719 = vadd.f32 %v666, %v718
          %720 = vmatmul.bf16.gmra.mxu0 %v679
          %v721 = vpop.f32.mrf.mxu0
          %v722 = vadd.f32 %v666, %v721
          %v723 = vpop.f32.mrf.mxu0
          %v724 = vadd.f32 %v666, %v723
          %725 = vmatmul.bf16.gmra.mxu0 %v682
          %v726 = vpop.f32.mrf.mxu0
          %v727 = vadd.f32 %v666, %v726
          %v728 = vpop.f32.mrf.mxu0
          %v729 = vadd.f32 %v666, %v728
          %730 = vmatmul.bf16.gmra.mxu0 %v685
          %v731 = vpop.f32.mrf.mxu0
          %v732 = vadd.f32 %v666, %v731
          %v733 = vpop.f32.mrf.mxu0
          %v734 = vadd.f32 %v666, %v733
          %735 = vmatmul.bf16.gmra.mxu0 %v688
          %v736 = vpop.f32.mrf.mxu0
          %v737 = vadd.f32 %v666, %v736
          %v738 = vpop.f32.mrf.mxu0
          %v739 = vadd.f32 %v666, %v738
          %740 = vmatmul.bf16.gmra.mxu0 %v691
          %v741 = vpop.f32.mrf.mxu0
          %v742 = vadd.f32 %v666, %v741
          %v743 = vpop.f32.mrf.mxu0
          %v744 = vadd.f32 %v666, %v743
          %745 = vdwg.mxu0
          %746 = vst.msk [vmem:[#allocation5] sm:$0xff] %vm621, %v707
          %747 = vst.msk [vmem:[#allocation5 + $0x8] sm:$0xff] %vm621, %v709
          %748 = vst.msk [vmem:[#allocation5 + $0x10] sm:$0xff] %vm621, %v712
          %749 = vst.msk [vmem:[#allocation5 + $0x18] sm:$0xff] %vm621, %v714
          %750 = vst.msk [vmem:[#allocation5 + $0x20] sm:$0xff] %vm621, %v717
          %751 = vst.msk [vmem:[#allocation5 + $0x28] sm:$0xff] %vm621, %v719
          %752 = vst.msk [vmem:[#allocation5 + $0x30] sm:$0xff] %vm621, %v722
          %753 = vst.msk [vmem:[#allocation5 + $0x38] sm:$0xff] %vm621, %v724
          %754 = vst.msk [vmem:[#allocation5 + $0x40] sm:$0xff] %vm621, %v727
          %755 = vst.msk [vmem:[#allocation5 + $0x48] sm:$0xff] %vm621, %v729
          %756 = vst.msk [vmem:[#allocation5 + $0x50] sm:$0xff] %vm621, %v732
          %757 = vst.msk [vmem:[#allocation5 + $0x58] sm:$0xff] %vm621, %v734
          %758 = vst.msk [vmem:[#allocation5 + $0x60] sm:$0xff] %vm621, %v737
          %759 = vst.msk [vmem:[#allocation5 + $0x68] sm:$0xff] %vm621, %v739
          %760 = vst.msk [vmem:[#allocation5 + $0x70] sm:$0xff] %vm621, %v742
          %761 = vst.msk [vmem:[#allocation5 + $0x78] sm:$0xff] %vm621, %v744
          %778 = vrot.lane.b32.xlu0 %v707, 64
          %v779 = vpop.permute.xlu0 %778
          %780 = vrot.lane.b32.xlu0 %v709, 64
          %v781 = vpop.permute.xlu0 %780
          %782 = vrot.lane.b32.xlu0 %v712, 64
          %v783 = vpop.permute.xlu0 %782
          %784 = vrot.lane.b32.xlu0 %v714, 64
          %v785 = vpop.permute.xlu0 %784
          %786 = vrot.lane.b32.xlu0 %v717, 64
          %v787 = vpop.permute.xlu0 %786
          %788 = vrot.lane.b32.xlu0 %v719, 64
          %v789 = vpop.permute.xlu0 %788
          %790 = vrot.lane.b32.xlu0 %v722, 64
          %v791 = vpop.permute.xlu0 %790
          %792 = vrot.lane.b32.xlu0 %v724, 64
          %v793 = vpop.permute.xlu0 %792
          %794 = vrot.lane.b32.xlu0 %v727, 64
          %v795 = vpop.permute.xlu0 %794
          %796 = vrot.lane.b32.xlu0 %v729, 64
          %v797 = vpop.permute.xlu0 %796
          %798 = vrot.lane.b32.xlu0 %v732, 64
          %v799 = vpop.permute.xlu0 %798
          %800 = vrot.lane.b32.xlu0 %v734, 64
          %v801 = vpop.permute.xlu0 %800
          %802 = vrot.lane.b32.xlu0 %v737, 64
          %v803 = vpop.permute.xlu0 %802
          %804 = vrot.lane.b32.xlu0 %v739, 64
          %v805 = vpop.permute.xlu0 %804
          %806 = vrot.lane.b32.xlu0 %v742, 64
          %v807 = vpop.permute.xlu0 %806
          %808 = vrot.lane.b32.xlu0 %v744, 64
          %v809 = vpop.permute.xlu0 %808
          %826 = vst.msk [vmem:[#allocation6] sm:$0xff] %vm621, %v779
          %827 = vst.msk [vmem:[#allocation6 + $0x8] sm:$0xff] %vm621, %v781
          %828 = vst.msk [vmem:[#allocation6 + $0x10] sm:$0xff] %vm621, %v783
          %829 = vst.msk [vmem:[#allocation6 + $0x18] sm:$0xff] %vm621, %v785
          %830 = vst.msk [vmem:[#allocation6 + $0x20] sm:$0xff] %vm621, %v787
          %831 = vst.msk [vmem:[#allocation6 + $0x28] sm:$0xff] %vm621, %v789
          %832 = vst.msk [vmem:[#allocation6 + $0x30] sm:$0xff] %vm621, %v791
          %833 = vst.msk [vmem:[#allocation6 + $0x38] sm:$0xff] %vm621, %v793
          %834 = vst.msk [vmem:[#allocation6 + $0x40] sm:$0xff] %vm621, %v795
          %835 = vst.msk [vmem:[#allocation6 + $0x48] sm:$0xff] %vm621, %v797
          %836 = vst.msk [vmem:[#allocation6 + $0x50] sm:$0xff] %vm621, %v799
          %837 = vst.msk [vmem:[#allocation6 + $0x58] sm:$0xff] %vm621, %v801
          %838 = vst.msk [vmem:[#allocation6 + $0x60] sm:$0xff] %vm621, %v803
          %839 = vst.msk [vmem:[#allocation6 + $0x68] sm:$0xff] %vm621, %v805
          %840 = vst.msk [vmem:[#allocation6 + $0x70] sm:$0xff] %vm621, %v807
          %841 = vst.msk [vmem:[#allocation6 + $0x78] sm:$0xff] %vm621, %v809
          %v842 = vld [vmem:[%s5] sm:$0xff]
          %v843 = vld [vmem:[%s5 + $0x8] sm:$0xff]
          %v844 = vld [vmem:[%s5 + $0x10] sm:$0xff]
          %v845 = vld [vmem:[%s5 + $0x18] sm:$0xff]
          %v846 = vsel %vm621, %v779, 0
          %v848 = vsel %vm621, %v781, 0
          %v850 = vsel %vm621, %v783, 0
          %v852 = vsel %vm621, %v785, 0
          %v854 = vsel %vm621, %v787, 0
          %v856 = vsel %vm621, %v789, 0
          %v858 = vsel %vm621, %v791, 0
          %v860 = vsel %vm621, %v793, 0
          %v862 = vsel %vm621, %v795, 0
          %v864 = vsel %vm621, %v797, 0
          %v866 = vsel %vm621, %v799, 0
          %v868 = vsel %vm621, %v801, 0
          %v870 = vsel %vm621, %v803, 0
          %v872 = vsel %vm621, %v805, 0
          %v874 = vsel %vm621, %v807, 0
          %v876 = vsel %vm621, %v809, 0
          %878 = vmatpush.msra.mxu0 0.0
          %879 = vmatpush.msra.mxu0 0.0
          %880 = vmatpush.msra.mxu0 0.0
          %881 = vmatpush.msra.mxu0 0.0
          %882 = vmatpush.msra.mxu0 0.0
          %883 = vmatpush.msra.mxu0 0.0
          %884 = vmatpush.msra.mxu0 0.0
          %885 = vmatpush.msra.mxu0 0.0
          %886 = vmatpush.msra.mxu0 0.0
          %887 = vmatpush.msra.mxu0 0.0
          %888 = vmatpush.msra.mxu0 0.0
          %889 = vmatpush.msra.mxu0 0.0
          %890 = vmatpush.msra.mxu0 %v845
          %891 = vmatpush.msra.mxu0 %v844
          %892 = vmatpush.msra.mxu0 %v843
          %893 = vmatpush.msra.mxu0 %v842
          %894 = vmatmul.f32.gmra.mxu0 %v846
          %v895 = vpop.f32.mrf.mxu0
          %v896 = vadd.f32 0.0, %v895
          %897 = vmatmul.f32.gmra.mxu0 %v848
          %v898 = vpop.f32.mrf.mxu0
          %v899 = vadd.f32 0.0, %v898
          %900 = vmatmul.f32.gmra.mxu0 %v850
          %v901 = vpop.f32.mrf.mxu0
          %v902 = vadd.f32 0.0, %v901
          %903 = vmatmul.f32.gmra.mxu0 %v852
          %v904 = vpop.f32.mrf.mxu0
          %v905 = vadd.f32 0.0, %v904
          %906 = vmatmul.f32.gmra.mxu0 %v854
          %v907 = vpop.f32.mrf.mxu0
          %v908 = vadd.f32 0.0, %v907
          %909 = vmatmul.f32.gmra.mxu0 %v856
          %v910 = vpop.f32.mrf.mxu0
          %v911 = vadd.f32 0.0, %v910
          %912 = vmatmul.f32.gmra.mxu0 %v858
          %v913 = vpop.f32.mrf.mxu0
          %v914 = vadd.f32 0.0, %v913
          %915 = vmatmul.f32.gmra.mxu0 %v860
          %v916 = vpop.f32.mrf.mxu0
          %v917 = vadd.f32 0.0, %v916
          %918 = vmatmul.f32.gmra.mxu0 %v862
          %v919 = vpop.f32.mrf.mxu0
          %v920 = vadd.f32 0.0, %v919
          %921 = vmatmul.f32.gmra.mxu0 %v864
          %v922 = vpop.f32.mrf.mxu0
          %v923 = vadd.f32 0.0, %v922
          %924 = vmatmul.f32.gmra.mxu0 %v866
          %v925 = vpop.f32.mrf.mxu0
          %v926 = vadd.f32 0.0, %v925
          %927 = vmatmul.f32.gmra.mxu0 %v868
          %v928 = vpop.f32.mrf.mxu0
          %v929 = vadd.f32 0.0, %v928
          %930 = vmatmul.f32.gmra.mxu0 %v870
          %v931 = vpop.f32.mrf.mxu0
          %v932 = vadd.f32 0.0, %v931
          %933 = vmatmul.f32.gmra.mxu0 %v872
          %v934 = vpop.f32.mrf.mxu0
          %v935 = vadd.f32 0.0, %v934
          %936 = vmatmul.f32.gmra.mxu0 %v874
          %v937 = vpop.f32.mrf.mxu0
          %v938 = vadd.f32 0.0, %v937
          %939 = vmatmul.f32.gmra.mxu0 %v876
          %v940 = vpop.f32.mrf.mxu0
          %v941 = vadd.f32 0.0, %v940
          %942 = vdwg.mxu0
          %943 = vst.msk [vmem:[#allocation7] sm:$0xff] %vm588, %v896
          %944 = vst.msk [vmem:[#allocation7 + $0x8] sm:$0xff] %vm588, %v899
          %945 = vst.msk [vmem:[#allocation7 + $0x10] sm:$0xff] %vm588, %v902
          %946 = vst.msk [vmem:[#allocation7 + $0x18] sm:$0xff] %vm588, %v905
          %947 = vst.msk [vmem:[#allocation7 + $0x20] sm:$0xff] %vm588, %v908
          %948 = vst.msk [vmem:[#allocation7 + $0x28] sm:$0xff] %vm588, %v911
          %949 = vst.msk [vmem:[#allocation7 + $0x30] sm:$0xff] %vm588, %v914
          %950 = vst.msk [vmem:[#allocation7 + $0x38] sm:$0xff] %vm588, %v917
          %951 = vst.msk [vmem:[#allocation7 + $0x40] sm:$0xff] %vm588, %v920
          %952 = vst.msk [vmem:[#allocation7 + $0x48] sm:$0xff] %vm588, %v923
          %953 = vst.msk [vmem:[#allocation7 + $0x50] sm:$0xff] %vm588, %v926
          %954 = vst.msk [vmem:[#allocation7 + $0x58] sm:$0xff] %vm588, %v929
          %955 = vst.msk [vmem:[#allocation7 + $0x60] sm:$0xff] %vm588, %v932
          %956 = vst.msk [vmem:[#allocation7 + $0x68] sm:$0xff] %vm588, %v935
          %957 = vst.msk [vmem:[#allocation7 + $0x70] sm:$0xff] %vm588, %v938
          %958 = vst.msk [vmem:[#allocation7 + $0x78] sm:$0xff] %vm588, %v941
          %975 = vrot.lane.b32.xlu0 %v896, 127
          %v976 = vpop.permute.xlu0 %975
          %977 = vrot.lane.b32.xlu0 %v899, 127
          %v978 = vpop.permute.xlu0 %977
          %979 = vrot.lane.b32.xlu0 %v902, 127
          %v980 = vpop.permute.xlu0 %979
          %981 = vrot.lane.b32.xlu0 %v905, 127
          %v982 = vpop.permute.xlu0 %981
          %983 = vrot.lane.b32.xlu0 %v908, 127
          %v984 = vpop.permute.xlu0 %983
          %985 = vrot.lane.b32.xlu0 %v911, 127
          %v986 = vpop.permute.xlu0 %985
          %987 = vrot.lane.b32.xlu0 %v914, 127
          %v988 = vpop.permute.xlu0 %987
          %989 = vrot.lane.b32.xlu0 %v917, 127
          %v990 = vpop.permute.xlu0 %989
          %991 = vrot.lane.b32.xlu0 %v920, 127
          %v992 = vpop.permute.xlu0 %991
          %993 = vrot.lane.b32.xlu0 %v923, 127
          %v994 = vpop.permute.xlu0 %993
          %995 = vrot.lane.b32.xlu0 %v926, 127
          %v996 = vpop.permute.xlu0 %995
          %997 = vrot.lane.b32.xlu0 %v929, 127
          %v998 = vpop.permute.xlu0 %997
          %999 = vrot.lane.b32.xlu0 %v932, 127
          %v1000 = vpop.permute.xlu0 %999
          %1001 = vrot.lane.b32.xlu0 %v935, 127
          %v1002 = vpop.permute.xlu0 %1001
          %1003 = vrot.lane.b32.xlu0 %v938, 127
          %v1004 = vpop.permute.xlu0 %1003
          %1005 = vrot.lane.b32.xlu0 %v941, 127
          %v1006 = vpop.permute.xlu0 %1005
          %1023 = vst.msk [vmem:[#allocation8] sm:$0xff] %vm588, %v976
          %1024 = vst.msk [vmem:[#allocation8 + $0x8] sm:$0xff] %vm588, %v978
          %1025 = vst.msk [vmem:[#allocation8 + $0x10] sm:$0xff] %vm588, %v980
          %1026 = vst.msk [vmem:[#allocation8 + $0x18] sm:$0xff] %vm588, %v982
          %1027 = vst.msk [vmem:[#allocation8 + $0x20] sm:$0xff] %vm588, %v984
          %1028 = vst.msk [vmem:[#allocation8 + $0x28] sm:$0xff] %vm588, %v986
          %1029 = vst.msk [vmem:[#allocation8 + $0x30] sm:$0xff] %vm588, %v988
          %1030 = vst.msk [vmem:[#allocation8 + $0x38] sm:$0xff] %vm588, %v990
          %1031 = vst.msk [vmem:[#allocation8 + $0x40] sm:$0xff] %vm588, %v992
          %1032 = vst.msk [vmem:[#allocation8 + $0x48] sm:$0xff] %vm588, %v994
          %1033 = vst.msk [vmem:[#allocation8 + $0x50] sm:$0xff] %vm588, %v996
          %1034 = vst.msk [vmem:[#allocation8 + $0x58] sm:$0xff] %vm588, %v998
          %1035 = vst.msk [vmem:[#allocation8 + $0x60] sm:$0xff] %vm588, %v1000
          %1036 = vst.msk [vmem:[#allocation8 + $0x68] sm:$0xff] %vm588, %v1002
          %1037 = vst.msk [vmem:[#allocation8 + $0x70] sm:$0xff] %vm588, %v1004
          %1038 = vst.msk [vmem:[#allocation8 + $0x78] sm:$0xff] %vm588, %v1006
        $region134: #{tpu_custom_call.1} parent=121 // pred_fallthru
          _
        %s1039 = sshra.s32 %s32, 7
        %s1040 = sand.u32 %s32, 127
        %s1041 = sadd.s32 %s1039, %s31
        %s1042 = smul.u32 %s1041, 128
        %s1043 = sshra.s32 %s32, 7
        %s1044 = sand.u32 %s32, 127
        %s1045 = sadd.s32 %s1042, %s1044
        %s1046 = sld [smem:[#allocation10 + %s1045]]
        %p1047 = scmp.gt.s32.totalorder %s1046, 0
        // Predicated region
        $region135: #{tpu_custom_call.1} parent=121 // pred_check
          %p1048 = pneg %p1047
        $region136: #{tpu_custom_call.1} parent=121 // pred_check_branch
          %1050 = sbr.rel (%p1048) target = $region138
        $region137: #{tpu_custom_call.1} parent=121 // pred_region
          %v1051 = vld [vmem:[%s3] sm:$0xff]
          %v1052 = vpack.c.bf16 %v1051, %v1051
          %v1053 = vld [vmem:[%s573] sm:$0xff]
          %v1054 = vld [vmem:[%s573 + $0x8] sm:$0xff]
          %v1055 = vld [vmem:[%s573 + $0x10] sm:$0xff]
          %v1056 = vld [vmem:[%s573 + $0x18] sm:$0xff]
          %v1057 = vld [vmem:[%s573 + $0x20] sm:$0xff]
          %v1058 = vld [vmem:[%s573 + $0x28] sm:$0xff]
          %v1059 = vld [vmem:[%s573 + $0x30] sm:$0xff]
          %v1060 = vld [vmem:[%s573 + $0x38] sm:$0xff]
          %v1061 = vld [vmem:[%s573 + $0x40] sm:$0xff]
          %v1062 = vld [vmem:[%s573 + $0x48] sm:$0xff]
          %v1063 = vld [vmem:[%s573 + $0x50] sm:$0xff]
          %v1064 = vld [vmem:[%s573 + $0x58] sm:$0xff]
          %v1065 = vld [vmem:[%s573 + $0x60] sm:$0xff]
          %v1066 = vld [vmem:[%s573 + $0x68] sm:$0xff]
          %v1067 = vld [vmem:[%s573 + $0x70] sm:$0xff]
          %v1068 = vld [vmem:[%s573 + $0x78] sm:$0xff]
          %v1069 = vpack.c.bf16 %v1054, %v1053
          %v1070 = vpack.c.bf16 %v1056, %v1055
          %v1071 = vpack.c.bf16 %v1058, %v1057
          %v1072 = vpack.c.bf16 %v1060, %v1059
          %v1073 = vpack.c.bf16 %v1062, %v1061
          %v1074 = vpack.c.bf16 %v1064, %v1063
          %v1075 = vpack.c.bf16 %v1066, %v1065
          %v1076 = vpack.c.bf16 %v1068, %v1067
          %v1077 = vld [vmem:[%s4] sm:$0x1]
          %v1079 = vperm.slane %v1077, 0
          %vm1081 = vcmask 64512
          %v1083 = vsel %vm1081, %v1069, 0
          %v1086 = vsel %vm1081, %v1070, 0
          %v1089 = vsel %vm1081, %v1071, 0
          %v1092 = vsel %vm1081, %v1072, 0
          %v1095 = vsel %vm1081, %v1073, 0
          %v1098 = vsel %vm1081, %v1074, 0
          %v1101 = vsel %vm1081, %v1075, 0
          %v1104 = vsel %vm1081, %v1076, 0
          %vm1106 = vcmask 1043456
          %v1108 = vsel %vm1106, %v1052, 0
          %1110 = vmatpush.bf16.msra.mxu0 0
          %1111 = vmatpush.bf16.msra.mxu0 0
          %1112 = vmatpush.bf16.msra.mxu0 0
          %1113 = vmatpush.bf16.msra.mxu0 0
          %1114 = vmatpush.bf16.msra.mxu0 0
          %1115 = vmatpush.bf16.msra.mxu0 0
          %1116 = vmatpush.bf16.msra.mxu0 0
          %1117 = vmatpush.bf16.msra.mxu0 %v1108
          %1118 = vmatmul.bf16.gmra.mxu0 %v1083
          %v1119 = vpop.f32.mrf.mxu0
          %v1120 = vadd.f32 %v1079, %v1119
          %v1121 = vpop.f32.mrf.mxu0
          %v1122 = vadd.f32 %v1079, %v1121
          %1123 = vmatmul.bf16.gmra.mxu0 %v1086
          %v1124 = vpop.f32.mrf.mxu0
          %v1125 = vadd.f32 %v1079, %v1124
          %v1126 = vpop.f32.mrf.mxu0
          %v1127 = vadd.f32 %v1079, %v1126
          %1128 = vmatmul.bf16.gmra.mxu0 %v1089
          %v1129 = vpop.f32.mrf.mxu0
          %v1130 = vadd.f32 %v1079, %v1129
          %v1131 = vpop.f32.mrf.mxu0
          %v1132 = vadd.f32 %v1079, %v1131
          %1133 = vmatmul.bf16.gmra.mxu0 %v1092
          %v1134 = vpop.f32.mrf.mxu0
          %v1135 = vadd.f32 %v1079, %v1134
          %v1136 = vpop.f32.mrf.mxu0
          %v1137 = vadd.f32 %v1079, %v1136
          %1138 = vmatmul.bf16.gmra.mxu0 %v1095
          %v1139 = vpop.f32.mrf.mxu0
          %v1140 = vadd.f32 %v1079, %v1139
          %v1141 = vpop.f32.mrf.mxu0
          %v1142 = vadd.f32 %v1079, %v1141
          %1143 = vmatmul.bf16.gmra.mxu0 %v1098
          %v1144 = vpop.f32.mrf.mxu0
          %v1145 = vadd.f32 %v1079, %v1144
          %v1146 = vpop.f32.mrf.mxu0
          %v1147 = vadd.f32 %v1079, %v1146
          %1148 = vmatmul.bf16.gmra.mxu0 %v1101
          %v1149 = vpop.f32.mrf.mxu0
          %v1150 = vadd.f32 %v1079, %v1149
          %v1151 = vpop.f32.mrf.mxu0
          %v1152 = vadd.f32 %v1079, %v1151
          %1153 = vmatmul.bf16.gmra.mxu0 %v1104
          %v1154 = vpop.f32.mrf.mxu0
          %v1155 = vadd.f32 %v1079, %v1154
          %v1156 = vpop.f32.mrf.mxu0
          %v1157 = vadd.f32 %v1079, %v1156
          %1158 = vdwg.mxu0
          %v1159 = vld [vmem:[#allocation6] sm:$0xff]
          %v1160 = vld [vmem:[#allocation6 + $0x8] sm:$0xff]
          %v1161 = vld [vmem:[#allocation6 + $0x10] sm:$0xff]
          %v1162 = vld [vmem:[#allocation6 + $0x18] sm:$0xff]
          %v1163 = vld [vmem:[#allocation6 + $0x20] sm:$0xff]
          %v1164 = vld [vmem:[#allocation6 + $0x28] sm:$0xff]
          %v1165 = vld [vmem:[#allocation6 + $0x30] sm:$0xff]
          %v1166 = vld [vmem:[#allocation6 + $0x38] sm:$0xff]
          %v1167 = vld [vmem:[#allocation6 + $0x40] sm:$0xff]
          %v1168 = vld [vmem:[#allocation6 + $0x48] sm:$0xff]
          %v1169 = vld [vmem:[#allocation6 + $0x50] sm:$0xff]
          %v1170 = vld [vmem:[#allocation6 + $0x58] sm:$0xff]
          %v1171 = vld [vmem:[#allocation6 + $0x60] sm:$0xff]
          %v1172 = vld [vmem:[#allocation6 + $0x68] sm:$0xff]
          %v1173 = vld [vmem:[#allocation6 + $0x70] sm:$0xff]
          %v1174 = vld [vmem:[#allocation6 + $0x78] sm:$0xff]
          %v1175 = vpack.c.bf16 %v1160, %v1159
          %v1176 = vpack.c.bf16 %v1162, %v1161
          %v1177 = vpack.c.bf16 %v1164, %v1163
          %v1178 = vpack.c.bf16 %v1166, %v1165
          %v1179 = vpack.c.bf16 %v1168, %v1167
          %v1180 = vpack.c.bf16 %v1170, %v1169
          %v1181 = vpack.c.bf16 %v1172, %v1171
          %v1182 = vpack.c.bf16 %v1174, %v1173
          %v1183 = vpack.c.bf16 %v1122, %v1120
          %v1184 = vpack.c.bf16 %v1127, %v1125
          %v1185 = vpack.c.bf16 %v1132, %v1130
          %v1186 = vpack.c.bf16 %v1137, %v1135
          %v1187 = vpack.c.bf16 %v1142, %v1140
          %v1188 = vpack.c.bf16 %v1147, %v1145
          %v1189 = vpack.c.bf16 %v1152, %v1150
          %v1190 = vpack.c.bf16 %v1157, %v1155
          %v1191 = vld [vmem:[%s513] sm:$0xf]
          %v1192 = vld [vmem:[%s513 + $0x4] sm:$0xf]
          %v1193 = vld [vmem:[%s513 + $0x8] sm:$0xf]
          %v1194 = vld [vmem:[%s513 + $0xc] sm:$0xf]
          %v1195 = vld [vmem:[%s513 + $0x10] sm:$0xf]
          %v1196 = vld [vmem:[%s513 + $0x14] sm:$0xf]
          %v1197 = vld [vmem:[%s513 + $0x18] sm:$0xf]
          %v1198 = vld [vmem:[%s513 + $0x1c] sm:$0xf]
          %v1199 = vld [vmem:[%s513 + $0x20] sm:$0xf]
          %v1200 = vld [vmem:[%s513 + $0x24] sm:$0xf]
          %v1201 = vld [vmem:[%s513 + $0x28] sm:$0xf]
          %v1202 = vld [vmem:[%s513 + $0x2c] sm:$0xf]
          %v1203 = vld [vmem:[%s513 + $0x30] sm:$0xf]
          %v1204 = vld [vmem:[%s513 + $0x34] sm:$0xf]
          %v1205 = vld [vmem:[%s513 + $0x38] sm:$0xf]
          %v1206 = vld [vmem:[%s513 + $0x3c] sm:$0xf]
          %v1207 = vunpack.c.l.bf16 %v1191
          %v1208 = vunpack.c.l.bf16 %v1192
          %v1209 = vunpack.c.l.bf16 %v1193
          %v1210 = vunpack.c.l.bf16 %v1194
          %v1211 = vunpack.c.l.bf16 %v1195
          %v1212 = vunpack.c.l.bf16 %v1196
          %v1213 = vunpack.c.l.bf16 %v1197
          %v1214 = vunpack.c.l.bf16 %v1198
          %v1215 = vunpack.c.l.bf16 %v1199
          %v1216 = vunpack.c.l.bf16 %v1200
          %v1217 = vunpack.c.l.bf16 %v1201
          %v1218 = vunpack.c.l.bf16 %v1202
          %v1219 = vunpack.c.l.bf16 %v1203
          %v1220 = vunpack.c.l.bf16 %v1204
          %v1221 = vunpack.c.l.bf16 %v1205
          %v1222 = vunpack.c.l.bf16 %v1206
          %v1223 = vld [vmem:[%s520] sm:$0xf]
          %v1224 = vld [vmem:[%s520 + $0x4] sm:$0xf]
          %v1225 = vld [vmem:[%s520 + $0x8] sm:$0xf]
          %v1226 = vld [vmem:[%s520 + $0xc] sm:$0xf]
          %v1227 = vld [vmem:[%s520 + $0x10] sm:$0xf]
          %v1228 = vld [vmem:[%s520 + $0x14] sm:$0xf]
          %v1229 = vld [vmem:[%s520 + $0x18] sm:$0xf]
          %v1230 = vld [vmem:[%s520 + $0x1c] sm:$0xf]
          %v1231 = vld [vmem:[%s520 + $0x20] sm:$0xf]
          %v1232 = vld [vmem:[%s520 + $0x24] sm:$0xf]
          %v1233 = vld [vmem:[%s520 + $0x28] sm:$0xf]
          %v1234 = vld [vmem:[%s520 + $0x2c] sm:$0xf]
          %v1235 = vld [vmem:[%s520 + $0x30] sm:$0xf]
          %v1236 = vld [vmem:[%s520 + $0x34] sm:$0xf]
          %v1237 = vld [vmem:[%s520 + $0x38] sm:$0xf]
          %v1238 = vld [vmem:[%s520 + $0x3c] sm:$0xf]
          %v1239 = vunpack.c.l.bf16 %v1223
          %v1240 = vunpack.c.l.bf16 %v1224
          %v1241 = vunpack.c.l.bf16 %v1225
          %v1242 = vunpack.c.l.bf16 %v1226
          %v1243 = vunpack.c.l.bf16 %v1227
          %v1244 = vunpack.c.l.bf16 %v1228
          %v1245 = vunpack.c.l.bf16 %v1229
          %v1246 = vunpack.c.l.bf16 %v1230
          %v1247 = vunpack.c.l.bf16 %v1231
          %v1248 = vunpack.c.l.bf16 %v1232
          %v1249 = vunpack.c.l.bf16 %v1233
          %v1250 = vunpack.c.l.bf16 %v1234
          %v1251 = vunpack.c.l.bf16 %v1235
          %v1252 = vunpack.c.l.bf16 %v1236
          %v1253 = vunpack.c.l.bf16 %v1237
          %v1254 = vunpack.c.l.bf16 %v1238
          %vm1255 = vcmp.gt.f32.partialorder %v1239, 0.0
          %vm1256 = vcmp.gt.f32.partialorder %v1240, 0.0
          %vm1257 = vcmp.gt.f32.partialorder %v1241, 0.0
          %vm1258 = vcmp.gt.f32.partialorder %v1242, 0.0
          %vm1259 = vcmp.gt.f32.partialorder %v1243, 0.0
          %vm1260 = vcmp.gt.f32.partialorder %v1244, 0.0
          %vm1261 = vcmp.gt.f32.partialorder %v1245, 0.0
          %vm1262 = vcmp.gt.f32.partialorder %v1246, 0.0
          %vm1263 = vcmp.gt.f32.partialorder %v1247, 0.0
          %vm1264 = vcmp.gt.f32.partialorder %v1248, 0.0
          %vm1265 = vcmp.gt.f32.partialorder %v1249, 0.0
          %vm1266 = vcmp.gt.f32.partialorder %v1250, 0.0
          %vm1267 = vcmp.gt.f32.partialorder %v1251, 0.0
          %vm1268 = vcmp.gt.f32.partialorder %v1252, 0.0
          %vm1269 = vcmp.gt.f32.partialorder %v1253, 0.0
          %vm1270 = vcmp.gt.f32.partialorder %v1254, 0.0
          %v1271 = vld [vmem:[#allocation7] sm:$0xff]
          %v1272 = vld [vmem:[#allocation7 + $0x8] sm:$0xff]
          %v1273 = vld [vmem:[#allocation7 + $0x10] sm:$0xff]
          %v1274 = vld [vmem:[#allocation7 + $0x18] sm:$0xff]
          %v1275 = vld [vmem:[#allocation7 + $0x20] sm:$0xff]
          %v1276 = vld [vmem:[#allocation7 + $0x28] sm:$0xff]
          %v1277 = vld [vmem:[#allocation7 + $0x30] sm:$0xff]
          %v1278 = vld [vmem:[#allocation7 + $0x38] sm:$0xff]
          %v1279 = vld [vmem:[#allocation7 + $0x40] sm:$0xff]
          %v1280 = vld [vmem:[#allocation7 + $0x48] sm:$0xff]
          %v1281 = vld [vmem:[#allocation7 + $0x50] sm:$0xff]
          %v1282 = vld [vmem:[#allocation7 + $0x58] sm:$0xff]
          %v1283 = vld [vmem:[#allocation7 + $0x60] sm:$0xff]
          %v1284 = vld [vmem:[#allocation7 + $0x68] sm:$0xff]
          %v1285 = vld [vmem:[#allocation7 + $0x70] sm:$0xff]
          %v1286 = vld [vmem:[#allocation7 + $0x78] sm:$0xff]
          %1288 = vset.pattern.permute.xlu0 0
          %1289 = vperm.xlu0 %1288, %v1271
          %v1290 = vpop.permute.xlu0 %1289
          %1293 = vset.pattern.permute.xlu0 0
          %1294 = vperm.xlu0 %1293, %v1272
          %v1295 = vpop.permute.xlu0 %1294
          %1298 = vset.pattern.permute.xlu0 0
          %1299 = vperm.xlu0 %1298, %v1273
          %v1300 = vpop.permute.xlu0 %1299
          %1303 = vset.pattern.permute.xlu0 0
          %1304 = vperm.xlu0 %1303, %v1274
          %v1305 = vpop.permute.xlu0 %1304
          %1308 = vset.pattern.permute.xlu0 0
          %1309 = vperm.xlu0 %1308, %v1275
          %v1310 = vpop.permute.xlu0 %1309
          %1313 = vset.pattern.permute.xlu0 0
          %1314 = vperm.xlu0 %1313, %v1276
          %v1315 = vpop.permute.xlu0 %1314
          %1318 = vset.pattern.permute.xlu0 0
          %1319 = vperm.xlu0 %1318, %v1277
          %v1320 = vpop.permute.xlu0 %1319
          %1323 = vset.pattern.permute.xlu0 0
          %1324 = vperm.xlu0 %1323, %v1278
          %v1325 = vpop.permute.xlu0 %1324
          %1328 = vset.pattern.permute.xlu0 0
          %1329 = vperm.xlu0 %1328, %v1279
          %v1330 = vpop.permute.xlu0 %1329
          %1333 = vset.pattern.permute.xlu0 0
          %1334 = vperm.xlu0 %1333, %v1280
          %v1335 = vpop.permute.xlu0 %1334
          %1338 = vset.pattern.permute.xlu0 0
          %1339 = vperm.xlu0 %1338, %v1281
          %v1340 = vpop.permute.xlu0 %1339
          %1343 = vset.pattern.permute.xlu0 0
          %1344 = vperm.xlu0 %1343, %v1282
          %v1345 = vpop.permute.xlu0 %1344
          %1348 = vset.pattern.permute.xlu0 0
          %1349 = vperm.xlu0 %1348, %v1283
          %v1350 = vpop.permute.xlu0 %1349
          %1353 = vset.pattern.permute.xlu0 0
          %1354 = vperm.xlu0 %1353, %v1284
          %v1355 = vpop.permute.xlu0 %1354
          %1358 = vset.pattern.permute.xlu0 0
          %1359 = vperm.xlu0 %1358, %v1285
          %v1360 = vpop.permute.xlu0 %1359
          %1363 = vset.pattern.permute.xlu0 0
          %1364 = vperm.xlu0 %1363, %v1286
          %v1365 = vpop.permute.xlu0 %1364
          %v1367 = vmul.f32 %v1207, %v1290
          %v1368 = vmul.f32 %v1208, %v1295
          %v1369 = vmul.f32 %v1209, %v1300
          %v1370 = vmul.f32 %v1210, %v1305
          %v1371 = vmul.f32 %v1211, %v1310
          %v1372 = vmul.f32 %v1212, %v1315
          %v1373 = vmul.f32 %v1213, %v1320
          %v1374 = vmul.f32 %v1214, %v1325
          %v1375 = vmul.f32 %v1215, %v1330
          %v1376 = vmul.f32 %v1216, %v1335
          %v1377 = vmul.f32 %v1217, %v1340
          %v1378 = vmul.f32 %v1218, %v1345
          %v1379 = vmul.f32 %v1219, %v1350
          %v1380 = vmul.f32 %v1220, %v1355
          %v1381 = vmul.f32 %v1221, %v1360
          %v1382 = vmul.f32 %v1222, %v1365
          %1391 = vrot.lane.b32.xlu0 %v1183, 32
          %v1392 = vpop.permute.xlu0 %1391
          %1393 = vrot.lane.b32.xlu0 %v1184, 32
          %v1394 = vpop.permute.xlu0 %1393
          %1395 = vrot.lane.b32.xlu0 %v1185, 32
          %v1396 = vpop.permute.xlu0 %1395
          %1397 = vrot.lane.b32.xlu0 %v1186, 32
          %v1398 = vpop.permute.xlu0 %1397
          %1399 = vrot.lane.b32.xlu0 %v1187, 32
          %v1400 = vpop.permute.xlu0 %1399
          %1401 = vrot.lane.b32.xlu0 %v1188, 32
          %v1402 = vpop.permute.xlu0 %1401
          %1403 = vrot.lane.b32.xlu0 %v1189, 32
          %v1404 = vpop.permute.xlu0 %1403
          %1405 = vrot.lane.b32.xlu0 %v1190, 32
          %v1406 = vpop.permute.xlu0 %1405
          %vm1407 = vcmask 261120
          %v1409 = vsel %vm1407, %v1175, 0
          %v1412 = vsel %vm1407, %v1176, 0
          %v1415 = vsel %vm1407, %v1177, 0
          %v1418 = vsel %vm1407, %v1178, 0
          %v1421 = vsel %vm1407, %v1179, 0
          %v1424 = vsel %vm1407, %v1180, 0
          %v1427 = vsel %vm1407, %v1181, 0
          %v1430 = vsel %vm1407, %v1182, 0
          %v1433 = vsel %vm1407, %v1392, 0
          %v1436 = vsel %vm1407, %v1394, 0
          %v1439 = vsel %vm1407, %v1396, 0
          %v1442 = vsel %vm1407, %v1398, 0
          %v1445 = vsel %vm1407, %v1400, 0
          %v1448 = vsel %vm1407, %v1402, 0
          %v1451 = vsel %vm1407, %v1404, 0
          %v1454 = vsel %vm1407, %v1406, 0
          %1456 = vmatpush.bf16.xpose.msra.mxu0 %v1454
          %1457 = vmatpush.bf16.xpose.msra.mxu0 %v1451
          %1458 = vmatpush.bf16.xpose.msra.mxu0 %v1448
          %1459 = vmatpush.bf16.xpose.msra.mxu0 %v1445
          %1460 = vmatpush.bf16.xpose.msra.mxu0 %v1442
          %1461 = vmatpush.bf16.xpose.msra.mxu0 %v1439
          %1462 = vmatpush.bf16.xpose.msra.mxu0 %v1436
          %1463 = vmatpush.bf16.xpose.msra.mxu0 %v1433
          %1464 = vmatmul.bf16.gmra.mxu0 %v1409
          %v1465 = vpop.f32.mrf.mxu0
          %v1466 = vadd.f32 %v1367, %v1465
          %v1467 = vpop.f32.mrf.mxu0
          %v1468 = vadd.f32 %v1368, %v1467
          %1469 = vmatmul.bf16.gmra.mxu0 %v1412
          %v1470 = vpop.f32.mrf.mxu0
          %v1471 = vadd.f32 %v1369, %v1470
          %v1472 = vpop.f32.mrf.mxu0
          %v1473 = vadd.f32 %v1370, %v1472
          %1474 = vmatmul.bf16.gmra.mxu0 %v1415
          %v1475 = vpop.f32.mrf.mxu0
          %v1476 = vadd.f32 %v1371, %v1475
          %v1477 = vpop.f32.mrf.mxu0
          %v1478 = vadd.f32 %v1372, %v1477
          %1479 = vmatmul.bf16.gmra.mxu0 %v1418
          %v1480 = vpop.f32.mrf.mxu0
          %v1481 = vadd.f32 %v1373, %v1480
          %v1482 = vpop.f32.mrf.mxu0
          %v1483 = vadd.f32 %v1374, %v1482
          %1484 = vmatmul.bf16.gmra.mxu0 %v1421
          %v1485 = vpop.f32.mrf.mxu0
          %v1486 = vadd.f32 %v1375, %v1485
          %v1487 = vpop.f32.mrf.mxu0
          %v1488 = vadd.f32 %v1376, %v1487
          %1489 = vmatmul.bf16.gmra.mxu0 %v1424
          %v1490 = vpop.f32.mrf.mxu0
          %v1491 = vadd.f32 %v1377, %v1490
          %v1492 = vpop.f32.mrf.mxu0
          %v1493 = vadd.f32 %v1378, %v1492
          %1494 = vmatmul.bf16.gmra.mxu0 %v1427
          %v1495 = vpop.f32.mrf.mxu0
          %v1496 = vadd.f32 %v1379, %v1495
          %v1497 = vpop.f32.mrf.mxu0
          %v1498 = vadd.f32 %v1380, %v1497
          %1499 = vmatmul.bf16.gmra.mxu0 %v1430
          %v1500 = vpop.f32.mrf.mxu0
          %v1501 = vadd.f32 %v1381, %v1500
          %v1502 = vpop.f32.mrf.mxu0
          %v1503 = vadd.f32 %v1382, %v1502
          %1504 = vdwg.mxu0
          %v1505 = vld [vmem:[#allocation8] sm:$0xff]
          %v1506 = vld [vmem:[#allocation8 + $0x8] sm:$0xff]
          %v1507 = vld [vmem:[#allocation8 + $0x10] sm:$0xff]
          %v1508 = vld [vmem:[#allocation8 + $0x18] sm:$0xff]
          %v1509 = vld [vmem:[#allocation8 + $0x20] sm:$0xff]
          %v1510 = vld [vmem:[#allocation8 + $0x28] sm:$0xff]
          %v1511 = vld [vmem:[#allocation8 + $0x30] sm:$0xff]
          %v1512 = vld [vmem:[#allocation8 + $0x38] sm:$0xff]
          %v1513 = vld [vmem:[#allocation8 + $0x40] sm:$0xff]
          %v1514 = vld [vmem:[#allocation8 + $0x48] sm:$0xff]
          %v1515 = vld [vmem:[#allocation8 + $0x50] sm:$0xff]
          %v1516 = vld [vmem:[#allocation8 + $0x58] sm:$0xff]
          %v1517 = vld [vmem:[#allocation8 + $0x60] sm:$0xff]
          %v1518 = vld [vmem:[#allocation8 + $0x68] sm:$0xff]
          %v1519 = vld [vmem:[#allocation8 + $0x70] sm:$0xff]
          %v1520 = vld [vmem:[#allocation8 + $0x78] sm:$0xff]
          %1522 = vset.pattern.permute.xlu0 0
          %1523 = vperm.xlu0 %1522, %v1505
          %v1524 = vpop.permute.xlu0 %1523
          %1527 = vset.pattern.permute.xlu0 0
          %1528 = vperm.xlu0 %1527, %v1506
          %v1529 = vpop.permute.xlu0 %1528
          %1532 = vset.pattern.permute.xlu0 0
          %1533 = vperm.xlu0 %1532, %v1507
          %v1534 = vpop.permute.xlu0 %1533
          %1537 = vset.pattern.permute.xlu0 0
          %1538 = vperm.xlu0 %1537, %v1508
          %v1539 = vpop.permute.xlu0 %1538
          %1542 = vset.pattern.permute.xlu0 0
          %1543 = vperm.xlu0 %1542, %v1509
          %v1544 = vpop.permute.xlu0 %1543
          %1547 = vset.pattern.permute.xlu0 0
          %1548 = vperm.xlu0 %1547, %v1510
          %v1549 = vpop.permute.xlu0 %1548
          %1552 = vset.pattern.permute.xlu0 0
          %1553 = vperm.xlu0 %1552, %v1511
          %v1554 = vpop.permute.xlu0 %1553
          %1557 = vset.pattern.permute.xlu0 0
          %1558 = vperm.xlu0 %1557, %v1512
          %v1559 = vpop.permute.xlu0 %1558
          %1562 = vset.pattern.permute.xlu0 0
          %1563 = vperm.xlu0 %1562, %v1513
          %v1564 = vpop.permute.xlu0 %1563
          %1567 = vset.pattern.permute.xlu0 0
          %1568 = vperm.xlu0 %1567, %v1514
          %v1569 = vpop.permute.xlu0 %1568
          %1572 = vset.pattern.permute.xlu0 0
          %1573 = vperm.xlu0 %1572, %v1515
          %v1574 = vpop.permute.xlu0 %1573
          %1577 = vset.pattern.permute.xlu0 0
          %1578 = vperm.xlu0 %1577, %v1516
          %v1579 = vpop.permute.xlu0 %1578
          %1582 = vset.pattern.permute.xlu0 0
          %1583 = vperm.xlu0 %1582, %v1517
          %v1584 = vpop.permute.xlu0 %1583
          %1587 = vset.pattern.permute.xlu0 0
          %1588 = vperm.xlu0 %1587, %v1518
          %v1589 = vpop.permute.xlu0 %1588
          %1592 = vset.pattern.permute.xlu0 0
          %1593 = vperm.xlu0 %1592, %v1519
          %v1594 = vpop.permute.xlu0 %1593
          %1597 = vset.pattern.permute.xlu0 0
          %1598 = vperm.xlu0 %1597, %v1520
          %v1599 = vpop.permute.xlu0 %1598
          %v1601 = vadd.f32 %v1466, %v1524
          %v1602 = vadd.f32 %v1468, %v1529
          %v1603 = vadd.f32 %v1471, %v1534
          %v1604 = vadd.f32 %v1473, %v1539
          %v1605 = vadd.f32 %v1476, %v1544
          %v1606 = vadd.f32 %v1478, %v1549
          %v1607 = vadd.f32 %v1481, %v1554
          %v1608 = vadd.f32 %v1483, %v1559
          %v1609 = vadd.f32 %v1486, %v1564
          %v1610 = vadd.f32 %v1488, %v1569
          %v1611 = vadd.f32 %v1491, %v1574
          %v1612 = vadd.f32 %v1493, %v1579
          %v1613 = vadd.f32 %v1496, %v1584
          %v1614 = vadd.f32 %v1498, %v1589
          %v1615 = vadd.f32 %v1501, %v1594
          %v1616 = vadd.f32 %v1503, %v1599
          %v1617 = vmul.f32 %v1601, 0.17677669
          %v1618 = vmul.f32 %v1602, 0.17677669
          %v1619 = vmul.f32 %v1603, 0.17677669
          %v1620 = vmul.f32 %v1604, 0.17677669
          %v1621 = vmul.f32 %v1605, 0.17677669
          %v1622 = vmul.f32 %v1606, 0.17677669
          %v1623 = vmul.f32 %v1607, 0.17677669
          %v1624 = vmul.f32 %v1608, 0.17677669
          %v1625 = vmul.f32 %v1609, 0.17677669
          %v1626 = vmul.f32 %v1610, 0.17677669
          %v1627 = vmul.f32 %v1611, 0.17677669
          %v1628 = vmul.f32 %v1612, 0.17677669
          %v1629 = vmul.f32 %v1613, 0.17677669
          %v1630 = vmul.f32 %v1614, 0.17677669
          %v1631 = vmul.f32 %v1615, 0.17677669
          %v1632 = vmul.f32 %v1616, 0.17677669
          %v1633 = vsel %vm1255, %v1617, -1e+30
          %v1634 = vsel %vm1256, %v1618, -1e+30
          %v1635 = vsel %vm1257, %v1619, -1e+30
          %v1636 = vsel %vm1258, %v1620, -1e+30
          %v1637 = vsel %vm1259, %v1621, -1e+30
          %v1638 = vsel %vm1260, %v1622, -1e+30
          %v1639 = vsel %vm1261, %v1623, -1e+30
          %v1640 = vsel %vm1262, %v1624, -1e+30
          %v1641 = vsel %vm1263, %v1625, -1e+30
          %v1642 = vsel %vm1264, %v1626, -1e+30
          %v1643 = vsel %vm1265, %v1627, -1e+30
          %v1644 = vsel %vm1266, %v1628, -1e+30
          %v1645 = vsel %vm1267, %v1629, -1e+30
          %v1646 = vsel %vm1268, %v1630, -1e+30
          %v1647 = vsel %vm1269, %v1631, -1e+30
          %v1648 = vsel %vm1270, %v1632, -1e+30
          %v1649 = vld [vmem:[#allocation2] sm:$0xff]
          %v1650 = vld [vmem:[#allocation2 + $0x8] sm:$0xff]
          %v1651 = vld [vmem:[#allocation2 + $0x10] sm:$0xff]
          %v1652 = vld [vmem:[#allocation2 + $0x18] sm:$0xff]
          %v1653 = vld [vmem:[#allocation2 + $0x20] sm:$0xff]
          %v1654 = vld [vmem:[#allocation2 + $0x28] sm:$0xff]
          %v1655 = vld [vmem:[#allocation2 + $0x30] sm:$0xff]
          %v1656 = vld [vmem:[#allocation2 + $0x38] sm:$0xff]
          %v1657 = vld [vmem:[#allocation2 + $0x40] sm:$0xff]
          %v1658 = vld [vmem:[#allocation2 + $0x48] sm:$0xff]
          %v1659 = vld [vmem:[#allocation2 + $0x50] sm:$0xff]
          %v1660 = vld [vmem:[#allocation2 + $0x58] sm:$0xff]
          %v1661 = vld [vmem:[#allocation2 + $0x60] sm:$0xff]
          %v1662 = vld [vmem:[#allocation2 + $0x68] sm:$0xff]
          %v1663 = vld [vmem:[#allocation2 + $0x70] sm:$0xff]
          %v1664 = vld [vmem:[#allocation2 + $0x78] sm:$0xff]
          %1665 = vmax.xlane.f32.xlu0 %v1633
          %v1666 = vpop.xlane.xlu0 %1665
          %1667 = vmax.xlane.f32.xlu0 %v1634
          %v1668 = vpop.xlane.xlu0 %1667
          %1669 = vmax.xlane.f32.xlu0 %v1635
          %v1670 = vpop.xlane.xlu0 %1669
          %1671 = vmax.xlane.f32.xlu0 %v1636
          %v1672 = vpop.xlane.xlu0 %1671
          %1673 = vmax.xlane.f32.xlu0 %v1637
          %v1674 = vpop.xlane.xlu0 %1673
          %1675 = vmax.xlane.f32.xlu0 %v1638
          %v1676 = vpop.xlane.xlu0 %1675
          %1677 = vmax.xlane.f32.xlu0 %v1639
          %v1678 = vpop.xlane.xlu0 %1677
          %1679 = vmax.xlane.f32.xlu0 %v1640
          %v1680 = vpop.xlane.xlu0 %1679
          %1681 = vmax.xlane.f32.xlu0 %v1641
          %v1682 = vpop.xlane.xlu0 %1681
          %1683 = vmax.xlane.f32.xlu0 %v1642
          %v1684 = vpop.xlane.xlu0 %1683
          %1685 = vmax.xlane.f32.xlu0 %v1643
          %v1686 = vpop.xlane.xlu0 %1685
          %1687 = vmax.xlane.f32.xlu0 %v1644
          %v1688 = vpop.xlane.xlu0 %1687
          %1689 = vmax.xlane.f32.xlu0 %v1645
          %v1690 = vpop.xlane.xlu0 %1689
          %1691 = vmax.xlane.f32.xlu0 %v1646
          %v1692 = vpop.xlane.xlu0 %1691
          %1693 = vmax.xlane.f32.xlu0 %v1647
          %v1694 = vpop.xlane.xlu0 %1693
          %1695 = vmax.xlane.f32.xlu0 %v1648
          %v1696 = vpop.xlane.xlu0 %1695
          %v1697 = vmax.f32 %v1649, %v1666
          %v1698 = vmax.f32 %v1650, %v1668
          %v1699 = vmax.f32 %v1651, %v1670
          %v1700 = vmax.f32 %v1652, %v1672
          %v1701 = vmax.f32 %v1653, %v1674
          %v1702 = vmax.f32 %v1654, %v1676
          %v1703 = vmax.f32 %v1655, %v1678
          %v1704 = vmax.f32 %v1656, %v1680
          %v1705 = vmax.f32 %v1657, %v1682
          %v1706 = vmax.f32 %v1658, %v1684
          %v1707 = vmax.f32 %v1659, %v1686
          %v1708 = vmax.f32 %v1660, %v1688
          %v1709 = vmax.f32 %v1661, %v1690
          %v1710 = vmax.f32 %v1662, %v1692
          %v1711 = vmax.f32 %v1663, %v1694
          %v1712 = vmax.f32 %v1664, %v1696
          %1714 = vset.pattern.permute.xlu0 0
          %1715 = vperm.xlu0 %1714, %v1697
          %v1716 = vpop.permute.xlu0 %1715
          %1719 = vset.pattern.permute.xlu0 0
          %1720 = vperm.xlu0 %1719, %v1698
          %v1721 = vpop.permute.xlu0 %1720
          %1724 = vset.pattern.permute.xlu0 0
          %1725 = vperm.xlu0 %1724, %v1699
          %v1726 = vpop.permute.xlu0 %1725
          %1729 = vset.pattern.permute.xlu0 0
          %1730 = vperm.xlu0 %1729, %v1700
          %v1731 = vpop.permute.xlu0 %1730
          %1734 = vset.pattern.permute.xlu0 0
          %1735 = vperm.xlu0 %1734, %v1701
          %v1736 = vpop.permute.xlu0 %1735
          %1739 = vset.pattern.permute.xlu0 0
          %1740 = vperm.xlu0 %1739, %v1702
          %v1741 = vpop.permute.xlu0 %1740
          %1744 = vset.pattern.permute.xlu0 0
          %1745 = vperm.xlu0 %1744, %v1703
          %v1746 = vpop.permute.xlu0 %1745
          %1749 = vset.pattern.permute.xlu0 0
          %1750 = vperm.xlu0 %1749, %v1704
          %v1751 = vpop.permute.xlu0 %1750
          %1754 = vset.pattern.permute.xlu0 0
          %1755 = vperm.xlu0 %1754, %v1705
          %v1756 = vpop.permute.xlu0 %1755
          %1759 = vset.pattern.permute.xlu0 0
          %1760 = vperm.xlu0 %1759, %v1706
          %v1761 = vpop.permute.xlu0 %1760
          %1764 = vset.pattern.permute.xlu0 0
          %1765 = vperm.xlu0 %1764, %v1707
          %v1766 = vpop.permute.xlu0 %1765
          %1769 = vset.pattern.permute.xlu0 0
          %1770 = vperm.xlu0 %1769, %v1708
          %v1771 = vpop.permute.xlu0 %1770
          %1774 = vset.pattern.permute.xlu0 0
          %1775 = vperm.xlu0 %1774, %v1709
          %v1776 = vpop.permute.xlu0 %1775
          %1779 = vset.pattern.permute.xlu0 0
          %1780 = vperm.xlu0 %1779, %v1710
          %v1781 = vpop.permute.xlu0 %1780
          %1784 = vset.pattern.permute.xlu0 0
          %1785 = vperm.xlu0 %1784, %v1711
          %v1786 = vpop.permute.xlu0 %1785
          %1789 = vset.pattern.permute.xlu0 0
          %1790 = vperm.xlu0 %1789, %v1712
          %v1791 = vpop.permute.xlu0 %1790
          %v1793 = vsub.f32 %v1633, %v1716
          %v1794 = vsub.f32 %v1634, %v1721
          %v1795 = vsub.f32 %v1635, %v1726
          %v1796 = vsub.f32 %v1636, %v1731
          %v1797 = vsub.f32 %v1637, %v1736
          %v1798 = vsub.f32 %v1638, %v1741
          %v1799 = vsub.f32 %v1639, %v1746
          %v1800 = vsub.f32 %v1640, %v1751
          %v1801 = vsub.f32 %v1641, %v1756
          %v1802 = vsub.f32 %v1642, %v1761
          %v1803 = vsub.f32 %v1643, %v1766
          %v1804 = vsub.f32 %v1644, %v1771
          %v1805 = vsub.f32 %v1645, %v1776
          %v1806 = vsub.f32 %v1646, %v1781
          %v1807 = vsub.f32 %v1647, %v1786
          %v1808 = vsub.f32 %v1648, %v1791
          %v1809 = vmul.f32 %v1793, 1.442695
          %v1810 = vpow.pop %v1809
          %v1811 = vmul.f32 %v1794, 1.442695
          %v1812 = vpow.pop %v1811
          %v1813 = vmul.f32 %v1795, 1.442695
          %v1814 = vpow.pop %v1813
          %v1815 = vmul.f32 %v1796, 1.442695
          %v1816 = vpow.pop %v1815
          %v1817 = vmul.f32 %v1797, 1.442695
          %v1818 = vpow.pop %v1817
          %v1819 = vmul.f32 %v1798, 1.442695
          %v1820 = vpow.pop %v1819
          %v1821 = vmul.f32 %v1799, 1.442695
          %v1822 = vpow.pop %v1821
          %v1823 = vmul.f32 %v1800, 1.442695
          %v1824 = vpow.pop %v1823
          %v1825 = vmul.f32 %v1801, 1.442695
          %v1826 = vpow.pop %v1825
          %v1827 = vmul.f32 %v1802, 1.442695
          %v1828 = vpow.pop %v1827
          %v1829 = vmul.f32 %v1803, 1.442695
          %v1830 = vpow.pop %v1829
          %v1831 = vmul.f32 %v1804, 1.442695
          %v1832 = vpow.pop %v1831
          %v1833 = vmul.f32 %v1805, 1.442695
          %v1834 = vpow.pop %v1833
          %v1835 = vmul.f32 %v1806, 1.442695
          %v1836 = vpow.pop %v1835
          %v1837 = vmul.f32 %v1807, 1.442695
          %v1838 = vpow.pop %v1837
          %v1839 = vmul.f32 %v1808, 1.442695
          %v1840 = vpow.pop %v1839
          %v1841 = vsel %vm1255, %v1810, 0.0
          %v1842 = vsel %vm1256, %v1812, 0.0
          %v1843 = vsel %vm1257, %v1814, 0.0
          %v1844 = vsel %vm1258, %v1816, 0.0
          %v1845 = vsel %vm1259, %v1818, 0.0
          %v1846 = vsel %vm1260, %v1820, 0.0
          %v1847 = vsel %vm1261, %v1822, 0.0
          %v1848 = vsel %vm1262, %v1824, 0.0
          %v1849 = vsel %vm1263, %v1826, 0.0
          %v1850 = vsel %vm1264, %v1828, 0.0
          %v1851 = vsel %vm1265, %v1830, 0.0
          %v1852 = vsel %vm1266, %v1832, 0.0
          %v1853 = vsel %vm1267, %v1834, 0.0
          %v1854 = vsel %vm1268, %v1836, 0.0
          %v1855 = vsel %vm1269, %v1838, 0.0
          %v1856 = vsel %vm1270, %v1840, 0.0
          %v1857 = vsub.f32 %v1649, %v1697
          %v1858 = vsub.f32 %v1650, %v1698
          %v1859 = vsub.f32 %v1651, %v1699
          %v1860 = vsub.f32 %v1652, %v1700
          %v1861 = vsub.f32 %v1653, %v1701
          %v1862 = vsub.f32 %v1654, %v1702
          %v1863 = vsub.f32 %v1655, %v1703
          %v1864 = vsub.f32 %v1656, %v1704
          %v1865 = vsub.f32 %v1657, %v1705
          %v1866 = vsub.f32 %v1658, %v1706
          %v1867 = vsub.f32 %v1659, %v1707
          %v1868 = vsub.f32 %v1660, %v1708
          %v1869 = vsub.f32 %v1661, %v1709
          %v1870 = vsub.f32 %v1662, %v1710
          %v1871 = vsub.f32 %v1663, %v1711
          %v1872 = vsub.f32 %v1664, %v1712
          %v1873 = vmul.f32 %v1857, 1.442695
          %v1874 = vpow.pop %v1873
          %v1875 = vmul.f32 %v1858, 1.442695
          %v1876 = vpow.pop %v1875
          %v1877 = vmul.f32 %v1859, 1.442695
          %v1878 = vpow.pop %v1877
          %v1879 = vmul.f32 %v1860, 1.442695
          %v1880 = vpow.pop %v1879
          %v1881 = vmul.f32 %v1861, 1.442695
          %v1882 = vpow.pop %v1881
          %v1883 = vmul.f32 %v1862, 1.442695
          %v1884 = vpow.pop %v1883
          %v1885 = vmul.f32 %v1863, 1.442695
          %v1886 = vpow.pop %v1885
          %v1887 = vmul.f32 %v1864, 1.442695
          %v1888 = vpow.pop %v1887
          %v1889 = vmul.f32 %v1865, 1.442695
          %v1890 = vpow.pop %v1889
          %v1891 = vmul.f32 %v1866, 1.442695
          %v1892 = vpow.pop %v1891
          %v1893 = vmul.f32 %v1867, 1.442695
          %v1894 = vpow.pop %v1893
          %v1895 = vmul.f32 %v1868, 1.442695
          %v1896 = vpow.pop %v1895
          %v1897 = vmul.f32 %v1869, 1.442695
          %v1898 = vpow.pop %v1897
          %v1899 = vmul.f32 %v1870, 1.442695
          %v1900 = vpow.pop %v1899
          %v1901 = vmul.f32 %v1871, 1.442695
          %v1902 = vpow.pop %v1901
          %v1903 = vmul.f32 %v1872, 1.442695
          %v1904 = vpow.pop %v1903
          %v1905 = vld [vmem:[#allocation3] sm:$0xff]
          %v1906 = vld [vmem:[#allocation3 + $0x8] sm:$0xff]
          %v1907 = vld [vmem:[#allocation3 + $0x10] sm:$0xff]
          %v1908 = vld [vmem:[#allocation3 + $0x18] sm:$0xff]
          %v1909 = vld [vmem:[#allocation3 + $0x20] sm:$0xff]
          %v1910 = vld [vmem:[#allocation3 + $0x28] sm:$0xff]
          %v1911 = vld [vmem:[#allocation3 + $0x30] sm:$0xff]
          %v1912 = vld [vmem:[#allocation3 + $0x38] sm:$0xff]
          %v1913 = vld [vmem:[#allocation3 + $0x40] sm:$0xff]
          %v1914 = vld [vmem:[#allocation3 + $0x48] sm:$0xff]
          %v1915 = vld [vmem:[#allocation3 + $0x50] sm:$0xff]
          %v1916 = vld [vmem:[#allocation3 + $0x58] sm:$0xff]
          %v1917 = vld [vmem:[#allocation3 + $0x60] sm:$0xff]
          %v1918 = vld [vmem:[#allocation3 + $0x68] sm:$0xff]
          %v1919 = vld [vmem:[#allocation3 + $0x70] sm:$0xff]
          %v1920 = vld [vmem:[#allocation3 + $0x78] sm:$0xff]
          %v1921 = vmul.f32 %v1874, %v1905
          %v1922 = vmul.f32 %v1876, %v1906
          %v1923 = vmul.f32 %v1878, %v1907
          %v1924 = vmul.f32 %v1880, %v1908
          %v1925 = vmul.f32 %v1882, %v1909
          %v1926 = vmul.f32 %v1884, %v1910
          %v1927 = vmul.f32 %v1886, %v1911
          %v1928 = vmul.f32 %v1888, %v1912
          %v1929 = vmul.f32 %v1890, %v1913
          %v1930 = vmul.f32 %v1892, %v1914
          %v1931 = vmul.f32 %v1894, %v1915
          %v1932 = vmul.f32 %v1896, %v1916
          %v1933 = vmul.f32 %v1898, %v1917
          %v1934 = vmul.f32 %v1900, %v1918
          %v1935 = vmul.f32 %v1902, %v1919
          %v1936 = vmul.f32 %v1904, %v1920
          %1937 = vadd.xlane.f32.xlu0 %v1841
          %v1938 = vpop.xlane.xlu0 %1937
          %1939 = vadd.xlane.f32.xlu0 %v1842
          %v1940 = vpop.xlane.xlu0 %1939
          %1941 = vadd.xlane.f32.xlu0 %v1843
          %v1942 = vpop.xlane.xlu0 %1941
          %1943 = vadd.xlane.f32.xlu0 %v1844
          %v1944 = vpop.xlane.xlu0 %1943
          %1945 = vadd.xlane.f32.xlu0 %v1845
          %v1946 = vpop.xlane.xlu0 %1945
          %1947 = vadd.xlane.f32.xlu0 %v1846
          %v1948 = vpop.xlane.xlu0 %1947
          %1949 = vadd.xlane.f32.xlu0 %v1847
          %v1950 = vpop.xlane.xlu0 %1949
          %1951 = vadd.xlane.f32.xlu0 %v1848
          %v1952 = vpop.xlane.xlu0 %1951
          %1953 = vadd.xlane.f32.xlu0 %v1849
          %v1954 = vpop.xlane.xlu0 %1953
          %1955 = vadd.xlane.f32.xlu0 %v1850
          %v1956 = vpop.xlane.xlu0 %1955
          %1957 = vadd.xlane.f32.xlu0 %v1851
          %v1958 = vpop.xlane.xlu0 %1957
          %1959 = vadd.xlane.f32.xlu0 %v1852
          %v1960 = vpop.xlane.xlu0 %1959
          %1961 = vadd.xlane.f32.xlu0 %v1853
          %v1962 = vpop.xlane.xlu0 %1961
          %1963 = vadd.xlane.f32.xlu0 %v1854
          %v1964 = vpop.xlane.xlu0 %1963
          %1965 = vadd.xlane.f32.xlu0 %v1855
          %v1966 = vpop.xlane.xlu0 %1965
          %1967 = vadd.xlane.f32.xlu0 %v1856
          %v1968 = vpop.xlane.xlu0 %1967
          %v1969 = vadd.f32 %v1921, %v1938
          %v1970 = vadd.f32 %v1922, %v1940
          %v1971 = vadd.f32 %v1923, %v1942
          %v1972 = vadd.f32 %v1924, %v1944
          %v1973 = vadd.f32 %v1925, %v1946
          %v1974 = vadd.f32 %v1926, %v1948
          %v1975 = vadd.f32 %v1927, %v1950
          %v1976 = vadd.f32 %v1928, %v1952
          %v1977 = vadd.f32 %v1929, %v1954
          %v1978 = vadd.f32 %v1930, %v1956
          %v1979 = vadd.f32 %v1931, %v1958
          %v1980 = vadd.f32 %v1932, %v1960
          %v1981 = vadd.f32 %v1933, %v1962
          %v1982 = vadd.f32 %v1934, %v1964
          %v1983 = vadd.f32 %v1935, %v1966
          %v1984 = vadd.f32 %v1936, %v1968
          %vm1985 = vcmask 7168
          %1986 = vst.msk [vmem:[#allocation3] sm:$0xff] %vm1985, %v1969
          %1987 = vst.msk [vmem:[#allocation3 + $0x8] sm:$0xff] %vm1985, %v1970
          %1988 = vst.msk [vmem:[#allocation3 + $0x10] sm:$0xff] %vm1985, %v1971
          %1989 = vst.msk [vmem:[#allocation3 + $0x18] sm:$0xff] %vm1985, %v1972
          %1990 = vst.msk [vmem:[#allocation3 + $0x20] sm:$0xff] %vm1985, %v1973
          %1991 = vst.msk [vmem:[#allocation3 + $0x28] sm:$0xff] %vm1985, %v1974
          %1992 = vst.msk [vmem:[#allocation3 + $0x30] sm:$0xff] %vm1985, %v1975
          %1993 = vst.msk [vmem:[#allocation3 + $0x38] sm:$0xff] %vm1985, %v1976
          %1994 = vst.msk [vmem:[#allocation3 + $0x40] sm:$0xff] %vm1985, %v1977
          %1995 = vst.msk [vmem:[#allocation3 + $0x48] sm:$0xff] %vm1985, %v1978
          %1996 = vst.msk [vmem:[#allocation3 + $0x50] sm:$0xff] %vm1985, %v1979
          %1997 = vst.msk [vmem:[#allocation3 + $0x58] sm:$0xff] %vm1985, %v1980
          %1998 = vst.msk [vmem:[#allocation3 + $0x60] sm:$0xff] %vm1985, %v1981
          %1999 = vst.msk [vmem:[#allocation3 + $0x68] sm:$0xff] %vm1985, %v1982
          %2000 = vst.msk [vmem:[#allocation3 + $0x70] sm:$0xff] %vm1985, %v1983
          %2001 = vst.msk [vmem:[#allocation3 + $0x78] sm:$0xff] %vm1985, %v1984
          %v2002 = vld [vmem:[#allocation4] sm:$0xff]
          %v2003 = vld [vmem:[#allocation4 + $0x8] sm:$0xff]
          %v2004 = vld [vmem:[#allocation4 + $0x10] sm:$0xff]
          %v2005 = vld [vmem:[#allocation4 + $0x18] sm:$0xff]
          %v2006 = vld [vmem:[#allocation4 + $0x20] sm:$0xff]
          %v2007 = vld [vmem:[#allocation4 + $0x28] sm:$0xff]
          %v2008 = vld [vmem:[#allocation4 + $0x30] sm:$0xff]
          %v2009 = vld [vmem:[#allocation4 + $0x38] sm:$0xff]
          %v2010 = vld [vmem:[#allocation4 + $0x40] sm:$0xff]
          %v2011 = vld [vmem:[#allocation4 + $0x48] sm:$0xff]
          %v2012 = vld [vmem:[#allocation4 + $0x50] sm:$0xff]
          %v2013 = vld [vmem:[#allocation4 + $0x58] sm:$0xff]
          %v2014 = vld [vmem:[#allocation4 + $0x60] sm:$0xff]
          %v2015 = vld [vmem:[#allocation4 + $0x68] sm:$0xff]
          %v2016 = vld [vmem:[#allocation4 + $0x70] sm:$0xff]
          %v2017 = vld [vmem:[#allocation4 + $0x78] sm:$0xff]
          %2019 = vset.pattern.permute.xlu0 0
          %2020 = vperm.xlu0 %2019, %v1874
          %v2021 = vpop.permute.xlu0 %2020
          %2024 = vset.pattern.permute.xlu0 0
          %2025 = vperm.xlu0 %2024, %v1876
          %v2026 = vpop.permute.xlu0 %2025
          %2029 = vset.pattern.permute.xlu0 0
          %2030 = vperm.xlu0 %2029, %v1878
          %v2031 = vpop.permute.xlu0 %2030
          %2034 = vset.pattern.permute.xlu0 0
          %2035 = vperm.xlu0 %2034, %v1880
          %v2036 = vpop.permute.xlu0 %2035
          %2039 = vset.pattern.permute.xlu0 0
          %2040 = vperm.xlu0 %2039, %v1882
          %v2041 = vpop.permute.xlu0 %2040
          %2044 = vset.pattern.permute.xlu0 0
          %2045 = vperm.xlu0 %2044, %v1884
          %v2046 = vpop.permute.xlu0 %2045
          %2049 = vset.pattern.permute.xlu0 0
          %2050 = vperm.xlu0 %2049, %v1886
          %v2051 = vpop.permute.xlu0 %2050
          %2054 = vset.pattern.permute.xlu0 0
          %2055 = vperm.xlu0 %2054, %v1888
          %v2056 = vpop.permute.xlu0 %2055
          %2059 = vset.pattern.permute.xlu0 0
          %2060 = vperm.xlu0 %2059, %v1890
          %v2061 = vpop.permute.xlu0 %2060
          %2064 = vset.pattern.permute.xlu0 0
          %2065 = vperm.xlu0 %2064, %v1892
          %v2066 = vpop.permute.xlu0 %2065
          %2069 = vset.pattern.permute.xlu0 0
          %2070 = vperm.xlu0 %2069, %v1894
          %v2071 = vpop.permute.xlu0 %2070
          %2074 = vset.pattern.permute.xlu0 0
          %2075 = vperm.xlu0 %2074, %v1896
          %v2076 = vpop.permute.xlu0 %2075
          %2079 = vset.pattern.permute.xlu0 0
          %2080 = vperm.xlu0 %2079, %v1898
          %v2081 = vpop.permute.xlu0 %2080
          %2084 = vset.pattern.permute.xlu0 0
          %2085 = vperm.xlu0 %2084, %v1900
          %v2086 = vpop.permute.xlu0 %2085
          %2089 = vset.pattern.permute.xlu0 0
          %2090 = vperm.xlu0 %2089, %v1902
          %v2091 = vpop.permute.xlu0 %2090
          %2094 = vset.pattern.permute.xlu0 0
          %2095 = vperm.xlu0 %2094, %v1904
          %v2096 = vpop.permute.xlu0 %2095
          %v2098 = vmul.f32 %v2021, %v2002
          %v2099 = vmul.f32 %v2026, %v2003
          %v2100 = vmul.f32 %v2031, %v2004
          %v2101 = vmul.f32 %v2036, %v2005
          %v2102 = vmul.f32 %v2041, %v2006
          %v2103 = vmul.f32 %v2046, %v2007
          %v2104 = vmul.f32 %v2051, %v2008
          %v2105 = vmul.f32 %v2056, %v2009
          %v2106 = vmul.f32 %v2061, %v2010
          %v2107 = vmul.f32 %v2066, %v2011
          %v2108 = vmul.f32 %v2071, %v2012
          %v2109 = vmul.f32 %v2076, %v2013
          %v2110 = vmul.f32 %v2081, %v2014
          %v2111 = vmul.f32 %v2086, %v2015
          %v2112 = vmul.f32 %v2091, %v2016
          %v2113 = vmul.f32 %v2096, %v2017
          %v2114 = vpack.c.bf16 %v1842, %v1841
          %v2115 = vpack.c.bf16 %v1844, %v1843
          %v2116 = vpack.c.bf16 %v1846, %v1845
          %v2117 = vpack.c.bf16 %v1848, %v1847
          %v2118 = vpack.c.bf16 %v1850, %v1849
          %v2119 = vpack.c.bf16 %v1852, %v1851
          %v2120 = vpack.c.bf16 %v1854, %v1853
          %v2121 = vpack.c.bf16 %v1856, %v1855
          %2122 = vrot.lane.b32.xlu0 %v1183, 96
          %v2123 = vpop.permute.xlu0 %2122
          %2124 = vrot.lane.b32.xlu0 %v1184, 96
          %v2125 = vpop.permute.xlu0 %2124
          %2126 = vrot.lane.b32.xlu0 %v1185, 96
          %v2127 = vpop.permute.xlu0 %2126
          %2128 = vrot.lane.b32.xlu0 %v1186, 96
          %v2129 = vpop.permute.xlu0 %2128
          %2130 = vrot.lane.b32.xlu0 %v1187, 96
          %v2131 = vpop.permute.xlu0 %2130
          %2132 = vrot.lane.b32.xlu0 %v1188, 96
          %v2133 = vpop.permute.xlu0 %2132
          %2134 = vrot.lane.b32.xlu0 %v1189, 96
          %v2135 = vpop.permute.xlu0 %2134
          %2136 = vrot.lane.b32.xlu0 %v1190, 96
          %v2137 = vpop.permute.xlu0 %2136
          %2146 = vmatpush.bf16.msra.mxu0 %v2137
          %2147 = vmatpush.bf16.msra.mxu0 %v2135
          %2148 = vmatpush.bf16.msra.mxu0 %v2133
          %2149 = vmatpush.bf16.msra.mxu0 %v2131
          %2150 = vmatpush.bf16.msra.mxu0 %v2129
          %2151 = vmatpush.bf16.msra.mxu0 %v2127
          %2152 = vmatpush.bf16.msra.mxu0 %v2125
          %2153 = vmatpush.bf16.msra.mxu0 %v2123
          %2154 = vmatmul.bf16.gmra.mxu0 %v2114
          %v2155 = vpop.f32.mrf.mxu0
          %v2156 = vadd.f32 0.0, %v2155
          %v2157 = vpop.f32.mrf.mxu0
          %v2158 = vadd.f32 0.0, %v2157
          %2159 = vmatmul.bf16.gmra.mxu0 %v2115
          %v2160 = vpop.f32.mrf.mxu0
          %v2161 = vadd.f32 0.0, %v2160
          %v2162 = vpop.f32.mrf.mxu0
          %v2163 = vadd.f32 0.0, %v2162
          %2164 = vmatmul.bf16.gmra.mxu0 %v2116
          %v2165 = vpop.f32.mrf.mxu0
          %v2166 = vadd.f32 0.0, %v2165
          %v2167 = vpop.f32.mrf.mxu0
          %v2168 = vadd.f32 0.0, %v2167
          %2169 = vmatmul.bf16.gmra.mxu0 %v2117
          %v2170 = vpop.f32.mrf.mxu0
          %v2171 = vadd.f32 0.0, %v2170
          %v2172 = vpop.f32.mrf.mxu0
          %v2173 = vadd.f32 0.0, %v2172
          %2174 = vmatmul.bf16.gmra.mxu0 %v2118
          %v2175 = vpop.f32.mrf.mxu0
          %v2176 = vadd.f32 0.0, %v2175
          %v2177 = vpop.f32.mrf.mxu0
          %v2178 = vadd.f32 0.0, %v2177
          %2179 = vmatmul.bf16.gmra.mxu0 %v2119
          %v2180 = vpop.f32.mrf.mxu0
          %v2181 = vadd.f32 0.0, %v2180
          %v2182 = vpop.f32.mrf.mxu0
          %v2183 = vadd.f32 0.0, %v2182
          %2184 = vmatmul.bf16.gmra.mxu0 %v2120
          %v2185 = vpop.f32.mrf.mxu0
          %v2186 = vadd.f32 0.0, %v2185
          %v2187 = vpop.f32.mrf.mxu0
          %v2188 = vadd.f32 0.0, %v2187
          %2189 = vmatmul.bf16.gmra.mxu0 %v2121
          %v2190 = vpop.f32.mrf.mxu0
          %v2191 = vadd.f32 0.0, %v2190
          %v2192 = vpop.f32.mrf.mxu0
          %v2193 = vadd.f32 0.0, %v2192
          %2194 = vdwg.mxu0
          %v2195 = vadd.f32 %v2098, %v2156
          %v2196 = vadd.f32 %v2099, %v2158
          %v2197 = vadd.f32 %v2100, %v2161
          %v2198 = vadd.f32 %v2101, %v2163
          %v2199 = vadd.f32 %v2102, %v2166
          %v2200 = vadd.f32 %v2103, %v2168
          %v2201 = vadd.f32 %v2104, %v2171
          %v2202 = vadd.f32 %v2105, %v2173
          %v2203 = vadd.f32 %v2106, %v2176
          %v2204 = vadd.f32 %v2107, %v2178
          %v2205 = vadd.f32 %v2108, %v2181
          %v2206 = vadd.f32 %v2109, %v2183
          %v2207 = vadd.f32 %v2110, %v2186
          %v2208 = vadd.f32 %v2111, %v2188
          %v2209 = vadd.f32 %v2112, %v2191
          %v2210 = vadd.f32 %v2113, %v2193
          %2211 = vst.msk [vmem:[#allocation4] sm:$0xff] %vm1407, %v2195
          %2212 = vst.msk [vmem:[#allocation4 + $0x8] sm:$0xff] %vm1407, %v2196
          %2213 = vst.msk [vmem:[#allocation4 + $0x10] sm:$0xff] %vm1407, %v2197
          %2214 = vst.msk [vmem:[#allocation4 + $0x18] sm:$0xff] %vm1407, %v2198
          %2215 = vst.msk [vmem:[#allocation4 + $0x20] sm:$0xff] %vm1407, %v2199
          %2216 = vst.msk [vmem:[#allocation4 + $0x28] sm:$0xff] %vm1407, %v2200
          %2217 = vst.msk [vmem:[#allocation4 + $0x30] sm:$0xff] %vm1407, %v2201
          %2218 = vst.msk [vmem:[#allocation4 + $0x38] sm:$0xff] %vm1407, %v2202
          %2219 = vst.msk [vmem:[#allocation4 + $0x40] sm:$0xff] %vm1407, %v2203
          %2220 = vst.msk [vmem:[#allocation4 + $0x48] sm:$0xff] %vm1407, %v2204
          %2221 = vst.msk [vmem:[#allocation4 + $0x50] sm:$0xff] %vm1407, %v2205
          %2222 = vst.msk [vmem:[#allocation4 + $0x58] sm:$0xff] %vm1407, %v2206
          %2223 = vst.msk [vmem:[#allocation4 + $0x60] sm:$0xff] %vm1407, %v2207
          %2224 = vst.msk [vmem:[#allocation4 + $0x68] sm:$0xff] %vm1407, %v2208
          %2225 = vst.msk [vmem:[#allocation4 + $0x70] sm:$0xff] %vm1407, %v2209
          %2226 = vst.msk [vmem:[#allocation4 + $0x78] sm:$0xff] %vm1407, %v2210
          %2227 = vst.msk [vmem:[#allocation2] sm:$0xff] %vm1985, %v1697
          %2228 = vst.msk [vmem:[#allocation2 + $0x8] sm:$0xff] %vm1985, %v1698
          %2229 = vst.msk [vmem:[#allocation2 + $0x10] sm:$0xff] %vm1985, %v1699
          %2230 = vst.msk [vmem:[#allocation2 + $0x18] sm:$0xff] %vm1985, %v1700
          %2231 = vst.msk [vmem:[#allocation2 + $0x20] sm:$0xff] %vm1985, %v1701
          %2232 = vst.msk [vmem:[#allocation2 + $0x28] sm:$0xff] %vm1985, %v1702
          %2233 = vst.msk [vmem:[#allocation2 + $0x30] sm:$0xff] %vm1985, %v1703
          %2234 = vst.msk [vmem:[#allocation2 + $0x38] sm:$0xff] %vm1985, %v1704
          %2235 = vst.msk [vmem:[#allocation2 + $0x40] sm:$0xff] %vm1985, %v1705
          %2236 = vst.msk [vmem:[#allocation2 + $0x48] sm:$0xff] %vm1985, %v1706
          %2237 = vst.msk [vmem:[#allocation2 + $0x50] sm:$0xff] %vm1985, %v1707
          %2238 = vst.msk [vmem:[#allocation2 + $0x58] sm:$0xff] %vm1985, %v1708
          %2239 = vst.msk [vmem:[#allocation2 + $0x60] sm:$0xff] %vm1985, %v1709
          %2240 = vst.msk [vmem:[#allocation2 + $0x68] sm:$0xff] %vm1985, %v1710
          %2241 = vst.msk [vmem:[#allocation2 + $0x70] sm:$0xff] %vm1985, %v1711
          %2242 = vst.msk [vmem:[#allocation2 + $0x78] sm:$0xff] %vm1985, %v1712
        $region138: #{tpu_custom_call.1} parent=121 // pred_fallthru
          _
        %p2243 = scmp.eq.s32.totalorder %s32, 1
        // Predicated region
        $region139: #{tpu_custom_call.1} parent=121 // pred_check
          %p2244 = pneg %p2243
        $region140: #{tpu_custom_call.1} parent=121 // pred_check_branch
          %2246 = sbr.rel (%p2244) target = $region142
        $region141: #{tpu_custom_call.1} parent=121 // pred_region
          %v2247 = vld [vmem:[#allocation3] sm:$0xff]
          %v2248 = vld [vmem:[#allocation3 + $0x8] sm:$0xff]
          %v2249 = vld [vmem:[#allocation3 + $0x10] sm:$0xff]
          %v2250 = vld [vmem:[#allocation3 + $0x18] sm:$0xff]
          %v2251 = vld [vmem:[#allocation3 + $0x20] sm:$0xff]
          %v2252 = vld [vmem:[#allocation3 + $0x28] sm:$0xff]
          %v2253 = vld [vmem:[#allocation3 + $0x30] sm:$0xff]
          %v2254 = vld [vmem:[#allocation3 + $0x38] sm:$0xff]
          %v2255 = vld [vmem:[#allocation3 + $0x40] sm:$0xff]
          %v2256 = vld [vmem:[#allocation3 + $0x48] sm:$0xff]
          %v2257 = vld [vmem:[#allocation3 + $0x50] sm:$0xff]
          %v2258 = vld [vmem:[#allocation3 + $0x58] sm:$0xff]
          %v2259 = vld [vmem:[#allocation3 + $0x60] sm:$0xff]
          %v2260 = vld [vmem:[#allocation3 + $0x68] sm:$0xff]
          %v2261 = vld [vmem:[#allocation3 + $0x70] sm:$0xff]
          %v2262 = vld [vmem:[#allocation3 + $0x78] sm:$0xff]
          %vm2263 = vcmp.gt.f32.partialorder %v2247, 0.0
          %vm2264 = vcmp.gt.f32.partialorder %v2248, 0.0
          %vm2265 = vcmp.gt.f32.partialorder %v2249, 0.0
          %vm2266 = vcmp.gt.f32.partialorder %v2250, 0.0
          %vm2267 = vcmp.gt.f32.partialorder %v2251, 0.0
          %vm2268 = vcmp.gt.f32.partialorder %v2252, 0.0
          %vm2269 = vcmp.gt.f32.partialorder %v2253, 0.0
          %vm2270 = vcmp.gt.f32.partialorder %v2254, 0.0
          %vm2271 = vcmp.gt.f32.partialorder %v2255, 0.0
          %vm2272 = vcmp.gt.f32.partialorder %v2256, 0.0
          %vm2273 = vcmp.gt.f32.partialorder %v2257, 0.0
          %vm2274 = vcmp.gt.f32.partialorder %v2258, 0.0
          %vm2275 = vcmp.gt.f32.partialorder %v2259, 0.0
          %vm2276 = vcmp.gt.f32.partialorder %v2260, 0.0
          %vm2277 = vcmp.gt.f32.partialorder %v2261, 0.0
          %vm2278 = vcmp.gt.f32.partialorder %v2262, 0.0
          %v2279 = vsel %vm2263, %v2247, 1.0
          %v2280 = vsel %vm2264, %v2248, 1.0
          %v2281 = vsel %vm2265, %v2249, 1.0
          %v2282 = vsel %vm2266, %v2250, 1.0
          %v2283 = vsel %vm2267, %v2251, 1.0
          %v2284 = vsel %vm2268, %v2252, 1.0
          %v2285 = vsel %vm2269, %v2253, 1.0
          %v2286 = vsel %vm2270, %v2254, 1.0
          %v2287 = vsel %vm2271, %v2255, 1.0
          %v2288 = vsel %vm2272, %v2256, 1.0
          %v2289 = vsel %vm2273, %v2257, 1.0
          %v2290 = vsel %vm2274, %v2258, 1.0
          %v2291 = vsel %vm2275, %v2259, 1.0
          %v2292 = vsel %vm2276, %v2260, 1.0
          %v2293 = vsel %vm2277, %v2261, 1.0
          %v2294 = vsel %vm2278, %v2262, 1.0
          %v2295 = vrcp.pop %v2279
          %v2296 = vrcp.pop %v2280
          %v2297 = vrcp.pop %v2281
          %v2298 = vrcp.pop %v2282
          %v2299 = vrcp.pop %v2283
          %v2300 = vrcp.pop %v2284
          %v2301 = vrcp.pop %v2285
          %v2302 = vrcp.pop %v2286
          %v2303 = vrcp.pop %v2287
          %v2304 = vrcp.pop %v2288
          %v2305 = vrcp.pop %v2289
          %v2306 = vrcp.pop %v2290
          %v2307 = vrcp.pop %v2291
          %v2308 = vrcp.pop %v2292
          %v2309 = vrcp.pop %v2293
          %v2310 = vrcp.pop %v2294
          %v2311 = vld [vmem:[#allocation5] sm:$0xff]
          %v2312 = vld [vmem:[#allocation5 + $0x8] sm:$0xff]
          %v2313 = vld [vmem:[#allocation5 + $0x10] sm:$0xff]
          %v2314 = vld [vmem:[#allocation5 + $0x18] sm:$0xff]
          %v2315 = vld [vmem:[#allocation5 + $0x20] sm:$0xff]
          %v2316 = vld [vmem:[#allocation5 + $0x28] sm:$0xff]
          %v2317 = vld [vmem:[#allocation5 + $0x30] sm:$0xff]
          %v2318 = vld [vmem:[#allocation5 + $0x38] sm:$0xff]
          %v2319 = vld [vmem:[#allocation5 + $0x40] sm:$0xff]
          %v2320 = vld [vmem:[#allocation5 + $0x48] sm:$0xff]
          %v2321 = vld [vmem:[#allocation5 + $0x50] sm:$0xff]
          %v2322 = vld [vmem:[#allocation5 + $0x58] sm:$0xff]
          %v2323 = vld [vmem:[#allocation5 + $0x60] sm:$0xff]
          %v2324 = vld [vmem:[#allocation5 + $0x68] sm:$0xff]
          %v2325 = vld [vmem:[#allocation5 + $0x70] sm:$0xff]
          %v2326 = vld [vmem:[#allocation5 + $0x78] sm:$0xff]
          %v2327 = vld [vmem:[#allocation4] sm:$0xff]
          %v2328 = vld [vmem:[#allocation4 + $0x8] sm:$0xff]
          %v2329 = vld [vmem:[#allocation4 + $0x10] sm:$0xff]
          %v2330 = vld [vmem:[#allocation4 + $0x18] sm:$0xff]
          %v2331 = vld [vmem:[#allocation4 + $0x20] sm:$0xff]
          %v2332 = vld [vmem:[#allocation4 + $0x28] sm:$0xff]
          %v2333 = vld [vmem:[#allocation4 + $0x30] sm:$0xff]
          %v2334 = vld [vmem:[#allocation4 + $0x38] sm:$0xff]
          %v2335 = vld [vmem:[#allocation4 + $0x40] sm:$0xff]
          %v2336 = vld [vmem:[#allocation4 + $0x48] sm:$0xff]
          %v2337 = vld [vmem:[#allocation4 + $0x50] sm:$0xff]
          %v2338 = vld [vmem:[#allocation4 + $0x58] sm:$0xff]
          %v2339 = vld [vmem:[#allocation4 + $0x60] sm:$0xff]
          %v2340 = vld [vmem:[#allocation4 + $0x68] sm:$0xff]
          %v2341 = vld [vmem:[#allocation4 + $0x70] sm:$0xff]
          %v2342 = vld [vmem:[#allocation4 + $0x78] sm:$0xff]
          %2344 = vset.pattern.permute.xlu0 0
          %2345 = vperm.xlu0 %2344, %v2295
          %v2346 = vpop.permute.xlu0 %2345
          %2349 = vset.pattern.permute.xlu0 0
          %2350 = vperm.xlu0 %2349, %v2296
          %v2351 = vpop.permute.xlu0 %2350
          %2354 = vset.pattern.permute.xlu0 0
          %2355 = vperm.xlu0 %2354, %v2297
          %v2356 = vpop.permute.xlu0 %2355
          %2359 = vset.pattern.permute.xlu0 0
          %2360 = vperm.xlu0 %2359, %v2298
          %v2361 = vpop.permute.xlu0 %2360
          %2364 = vset.pattern.permute.xlu0 0
          %2365 = vperm.xlu0 %2364, %v2299
          %v2366 = vpop.permute.xlu0 %2365
          %2369 = vset.pattern.permute.xlu0 0
          %2370 = vperm.xlu0 %2369, %v2300
          %v2371 = vpop.permute.xlu0 %2370
          %2374 = vset.pattern.permute.xlu0 0
          %2375 = vperm.xlu0 %2374, %v2301
          %v2376 = vpop.permute.xlu0 %2375
          %2379 = vset.pattern.permute.xlu0 0
          %2380 = vperm.xlu0 %2379, %v2302
          %v2381 = vpop.permute.xlu0 %2380
          %2384 = vset.pattern.permute.xlu0 0
          %2385 = vperm.xlu0 %2384, %v2303
          %v2386 = vpop.permute.xlu0 %2385
          %2389 = vset.pattern.permute.xlu0 0
          %2390 = vperm.xlu0 %2389, %v2304
          %v2391 = vpop.permute.xlu0 %2390
          %2394 = vset.pattern.permute.xlu0 0
          %2395 = vperm.xlu0 %2394, %v2305
          %v2396 = vpop.permute.xlu0 %2395
          %2399 = vset.pattern.permute.xlu0 0
          %2400 = vperm.xlu0 %2399, %v2306
          %v2401 = vpop.permute.xlu0 %2400
          %2404 = vset.pattern.permute.xlu0 0
          %2405 = vperm.xlu0 %2404, %v2307
          %v2406 = vpop.permute.xlu0 %2405
          %2409 = vset.pattern.permute.xlu0 0
          %2410 = vperm.xlu0 %2409, %v2308
          %v2411 = vpop.permute.xlu0 %2410
          %2414 = vset.pattern.permute.xlu0 0
          %2415 = vperm.xlu0 %2414, %v2309
          %v2416 = vpop.permute.xlu0 %2415
          %2419 = vset.pattern.permute.xlu0 0
          %2420 = vperm.xlu0 %2419, %v2310
          %v2421 = vpop.permute.xlu0 %2420
          %v2423 = vmul.f32 %v2327, %v2346
          %v2424 = vmul.f32 %v2328, %v2351
          %v2425 = vmul.f32 %v2329, %v2356
          %v2426 = vmul.f32 %v2330, %v2361
          %v2427 = vmul.f32 %v2331, %v2366
          %v2428 = vmul.f32 %v2332, %v2371
          %v2429 = vmul.f32 %v2333, %v2376
          %v2430 = vmul.f32 %v2334, %v2381
          %v2431 = vmul.f32 %v2335, %v2386
          %v2432 = vmul.f32 %v2336, %v2391
          %v2433 = vmul.f32 %v2337, %v2396
          %v2434 = vmul.f32 %v2338, %v2401
          %v2435 = vmul.f32 %v2339, %v2406
          %v2436 = vmul.f32 %v2340, %v2411
          %v2437 = vmul.f32 %v2341, %v2416
          %v2438 = vmul.f32 %v2342, %v2421
          %v2439 = vadd.f32 %v2311, %v2423
          %v2440 = vadd.f32 %v2312, %v2424
          %v2441 = vadd.f32 %v2313, %v2425
          %v2442 = vadd.f32 %v2314, %v2426
          %v2443 = vadd.f32 %v2315, %v2427
          %v2444 = vadd.f32 %v2316, %v2428
          %v2445 = vadd.f32 %v2317, %v2429
          %v2446 = vadd.f32 %v2318, %v2430
          %v2447 = vadd.f32 %v2319, %v2431
          %v2448 = vadd.f32 %v2320, %v2432
          %v2449 = vadd.f32 %v2321, %v2433
          %v2450 = vadd.f32 %v2322, %v2434
          %v2451 = vadd.f32 %v2323, %v2435
          %v2452 = vadd.f32 %v2324, %v2436
          %v2453 = vadd.f32 %v2325, %v2437
          %v2454 = vadd.f32 %v2326, %v2438
          %vm2455 = vcmask 261120
          %2456 = vst.msk [vmem:[%s581] sm:$0xff] %vm2455, %v2439
          %2457 = vst.msk [vmem:[%s581 + $0x8] sm:$0xff] %vm2455, %v2440
          %2458 = vst.msk [vmem:[%s581 + $0x10] sm:$0xff] %vm2455, %v2441
          %2459 = vst.msk [vmem:[%s581 + $0x18] sm:$0xff] %vm2455, %v2442
          %2460 = vst.msk [vmem:[%s581 + $0x20] sm:$0xff] %vm2455, %v2443
          %2461 = vst.msk [vmem:[%s581 + $0x28] sm:$0xff] %vm2455, %v2444
          %2462 = vst.msk [vmem:[%s581 + $0x30] sm:$0xff] %vm2455, %v2445
          %2463 = vst.msk [vmem:[%s581 + $0x38] sm:$0xff] %vm2455, %v2446
          %2464 = vst.msk [vmem:[%s581 + $0x40] sm:$0xff] %vm2455, %v2447
          %2465 = vst.msk [vmem:[%s581 + $0x48] sm:$0xff] %vm2455, %v2448
          %2466 = vst.msk [vmem:[%s581 + $0x50] sm:$0xff] %vm2455, %v2449
          %2467 = vst.msk [vmem:[%s581 + $0x58] sm:$0xff] %vm2455, %v2450
          %2468 = vst.msk [vmem:[%s581 + $0x60] sm:$0xff] %vm2455, %v2451
          %2469 = vst.msk [vmem:[%s581 + $0x68] sm:$0xff] %vm2455, %v2452
          %2470 = vst.msk [vmem:[%s581 + $0x70] sm:$0xff] %vm2455, %v2453
          %2471 = vst.msk [vmem:[%s581 + $0x78] sm:$0xff] %vm2455, %v2454
        $region142: #{tpu_custom_call.1} parent=121 // pred_fallthru
          _
        %s2472 = smul.u32 16, %s31
        %p2473 = scmp.lt.s32.totalorder %s2472, 31
        %s2474 = scalar_select %p2473, %s2472, 31
        %s2475 = smul.addr %s2474, 8
        %s2476 = scalar_lea.vmem %s8, %s2475
        // Predicated region
        $region143: #{tpu_custom_call.1} parent=121 // pred_check
          %p2477 = pneg %p228
        $region144: #{tpu_custom_call.1} parent=121 // pred_check_branch
          %2479 = sbr.rel (%p2477) target = $region146
        $region145: #{tpu_custom_call.1} parent=121 // pred_region
          %s2480 = smul.u32 16, %s31
        $region146: #{tpu_custom_call.1} parent=121 // pred_fallthru
          _
      $region122: #{tpu_custom_call.1} parent=5 // pred_fallthru
        _
      %p2481 = scmp.le.s32.totalorder 2, %s22
      // Predicated region
      $region147: #{tpu_custom_call.1} parent=5 // pred_check
        %p2482 = pneg %p2481
      $region148: #{tpu_custom_call.1} parent=5 // pred_check_branch
        %2484 = sbr.rel (%p2482) target = $region150
      $region149: #{tpu_custom_call.1} parent=5 // pred_region
        %s2485 = ssub.s32 %s22, 2
        // Predicated region
        $region151: #{tpu_custom_call.1} parent=149 // pred_check
          %p2486 = pneg %p234
        $region152: #{tpu_custom_call.1} parent=149 // pred_check_branch
          %2488 = sbr.rel (%p2486) target = $region154
        $region153: #{tpu_custom_call.1} parent=149 // pred_region
          %s2489 = smul.u32 16, %s33
          %p2490 = scmp.lt.s32.totalorder %s2489, 31
          %s2491 = scalar_select %p2490, %s2489, 31
          %s2492 = smul.addr %s2491, 8
          %s2493 = scalar_lea.vmem %s8, %s2492
        $region154: #{tpu_custom_call.1} parent=149 // pred_fallthru
          _
      $region150: #{tpu_custom_call.1} parent=5 // pred_fallthru
        _
    $region6: #{tpu_custom_call.1} parent=1 // loop_footer
      %s26 = sadd.s32 1, %s22
    $region7: #{tpu_custom_call.1} parent=1 // loop_footer_branch
      %21 = sbr.rel target = $region3
    $region8: #{tpu_custom_call.1} parent=1 // loop_exit
      _

</llo_original>
